<compile_context>
chip_gen: v7x
topology: tpu7x:2x2x1
jax: 0.10.0
libtpu: 0.0.40
codegen_flags: <defaults>
</compile_context>

<pallas_src>
import functools
import math

import jax
import jax.numpy as jnp
from jax import lax
from jax.experimental import pallas as pl
from jax.experimental.pallas import tpu as pltpu

_DEFAULT_MAX_TILE_N = 512          # rows per grid step in the tiled path
_VMEM_LIMIT = 32 * 1024 * 1024     # safe on v5e/v6e/v7x


def _compiler_params(semantics):
    return pltpu.CompilerParams(
        dimension_semantics=semantics,
        vmem_limit_bytes=_VMEM_LIMIT,
    )


def _layernorm(y, gamma, beta, eps):
    mu = jnp.mean(y, axis=-1, keepdims=True)
    var = jnp.mean((y - mu) ** 2, axis=-1, keepdims=True)
    return (y - mu) * lax.rsqrt(var + eps) * gamma + beta


def _attention_from_stats(q, v, kv, ksum, scale, n_f, num_heads, head_dim, use_bf16):
    """Per-tile linear attention given raw q/v and global (unnormalized) stats."""
    acc = None
    for hh in range(num_heads):
        sl = slice(hh * head_dim, (hh + 1) * head_dim)
        q_h = q[:, sl]
        v_h = v[:, sl]
        kv_h = kv[:, sl]
        ksum_h = ksum[:, sl]
        if use_bf16:
            num = jnp.dot(q_h.astype(jnp.bfloat16), kv_h.astype(jnp.bfloat16),
                          preferred_element_type=jnp.float32)
        else:
            num = jnp.dot(q_h, kv_h, preferred_element_type=jnp.float32)
        num = num * scale + n_f * v_h
        denom = jnp.sum(q_h * ksum_h, axis=-1, keepdims=True) * scale + n_f
        contrib = num * pl.reciprocal(denom, approx=False)
        acc = contrib if acc is None else acc + contrib
    return acc * (1.0 / num_heads)


def _per_head_kv(k, v, num_heads, head_dim, use_bf16):
    """kv[m, h*C + d] = sum_l k[l, h*C + m] * v[l, h*C + d]  (contract node axis)."""
    parts = []
    for hh in range(num_heads):
        sl = slice(hh * head_dim, (hh + 1) * head_dim)
        k_h = k[:, sl]
        v_h = v[:, sl]
        if use_bf16:
            k_h = k_h.astype(jnp.bfloat16)
            v_h = v_h.astype(jnp.bfloat16)
        parts.append(lax.dot_general(k_h, v_h, (((0,), (0,)), ((), ())),
                                     preferred_element_type=jnp.float32))
    return parts[0] if num_heads == 1 else jnp.concatenate(parts, axis=1)


# ----------------------------- kernels -----------------------------

def fused_forward_kernel(x_ref, w0_ref, b0_ref, wqkv_ref, bqkv_ref, g_ref, be_ref,
                         o_ref, *, num_layers, num_heads, head_dim, alpha, eps,
                         use_bf16):
    """Entire forward (embedding + all layers) for a graph that fits one tile."""
    n = x_ref.shape[0]
    n_f = float(n)
    hc = num_heads * head_dim

    x = x_ref[...]
    w0 = w0_ref[...]
    if use_bf16:
        xm, w0m = x.astype(jnp.bfloat16), w0.astype(jnp.bfloat16)
    else:
        xm, w0m = x, w0
    h = jnp.dot(xm, w0m, preferred_element_type=jnp.float32) + b0_ref[...]
    h = jnp.maximum(_layernorm(h, g_ref[0], be_ref[0], eps), 0.0)

    for l in range(num_layers):
        w = wqkv_ref[l]                       # [hidden, 3*hc]
        b = bqkv_ref[l]                       # [1, 3*hc]
        if use_bf16:
            hm, wm = h.astype(jnp.bfloat16), w.astype(jnp.bfloat16)
        else:
            hm, wm = h, w
        qkv = jnp.dot(hm, wm, preferred_element_type=jnp.float32) + b
        q = qkv[:, 0:hc]
        k = qkv[:, hc:2 * hc]
        v = qkv[:, 2 * hc:3 * hc]

        # staged reductions: sublane first, then lane -> [1,1]
        sq = jnp.sum(jnp.sum(q * q, axis=0, keepdims=True), axis=1, keepdims=True)
        sk = jnp.sum(jnp.sum(k * k, axis=0, keepdims=True), axis=1, keepdims=True)
        scale = lax.rsqrt(sq) * lax.rsqrt(sk)          # 1/(||q||_F * ||k||_F)
        ksum = jnp.sum(k, axis=0, keepdims=True)       # [1, hc]
        kv = _per_head_kv(k, v, num_heads, head_dim, use_bf16)   # [C, hc]

        attn = _attention_from_stats(q, v, kv, ksum, scale, n_f,
                                     num_heads, head_dim, use_bf16)
        y = alpha * attn + (1.0 - alpha) * h           # residual
        h = _layernorm(y, g_ref[l + 1], be_ref[l + 1], eps)

    o_ref[...] = h.astype(o_ref.dtype)


def embed_kernel(x_ref, w_ref, b_ref, g_ref, be_ref, o_ref, *, eps, use_bf16):
    """fc0 + LayerNorm + relu, fused, per N-tile (tiled path)."""
    x = x_ref[...]
    w = w_ref[...]
    if use_bf16:
        x = x.astype(jnp.bfloat16)
        w = w.astype(jnp.bfloat16)
    h = jnp.dot(x, w, preferred_element_type=jnp.float32) + b_ref[...]
    y = _layernorm(h, g_ref[...], be_ref[...], eps)
    o_ref[...] = jnp.maximum(y, 0.0).astype(o_ref.dtype)


def stats_kernel(h_ref, w_ref, b_ref, kv_ref, vec_ref, *, num_heads, head_dim,
                 n_actual, masked, use_bf16):
    """Pass 1 (tiled path): fused QKV + global attention statistics, accumulated
    across the N grid into VMEM-resident output blocks.
      kv_ref:  [C, H*C]   sum_l k^T v  (per head, concatenated along lanes)
      vec_ref: [3, H*C]   row0 = sum_l k, row1 = colsum q^2, row2 = colsum k^2
    """
    i = pl.program_id(0)

    @pl.when(i == 0)
    def _init():
        kv_ref[...] = jnp.zeros_like(kv_ref)
        vec_ref[...] = jnp.zeros_like(vec_ref)

    x = h_ref[...]
    w = w_ref[...]
    if use_bf16:
        xm, wm = x.astype(jnp.bfloat16), w.astype(jnp.bfloat16)
    else:
        xm, wm = x, w
    qkv = jnp.dot(xm, wm, preferred_element_type=jnp.float32) + b_ref[...]

    hc = num_heads * head_dim
    q = qkv[:, 0:hc]
    k = qkv[:, hc:2 * hc]
    v = qkv[:, 2 * hc:3 * hc]

    if masked:  # zero padded rows so the bias does not pollute the global stats
        tile_n = h_ref.shape[0]
        rows = lax.broadcasted_iota(jnp.int32, (tile_n, 1), 0) + i * tile_n
        valid = rows < n_actual
        q = jnp.where(valid, q, 0.0)
        k = jnp.where(valid, k, 0.0)
        v = jnp.where(valid, v, 0.0)

    ksum = jnp.sum(k, axis=0, keepdims=True)        # [1, hc]
    sq_c = jnp.sum(q * q, axis=0, keepdims=True)    # [1, hc]
    sk_c = jnp.sum(k * k, axis=0, keepdims=True)    # [1, hc]
    vec_ref[...] += jnp.concatenate([ksum, sq_c, sk_c], axis=0)

    kv_ref[...] += _per_head_kv(k, v, num_heads, head_dim, use_bf16)


def apply_kernel(h_ref, w_ref, b_ref, kv_ref, vec_ref, g_ref, be_ref, o_ref, *,
                 num_heads, head_dim, n_actual, alpha, eps, use_bf16):
    """Pass 2 (tiled path): recompute q/v for this tile, apply attention with the
    folded Frobenius scale, mean over heads, residual + LayerNorm."""
    x = h_ref[...]
    w = w_ref[...]
    if use_bf16:
        xm, wm = x.astype(jnp.bfloat16), w.astype(jnp.bfloat16)
    else:
        xm, wm = x, w
    qkv = jnp.dot(xm, wm, preferred_element_type=jnp.float32) + b_ref[...]

    hc = num_heads * head_dim
    q = qkv[:, 0:hc]
    v = qkv[:, 2 * hc:3 * hc]

    vec = vec_ref[...]                                     # [3, hc]
    ksum = vec[0:1, :]
    sq = jnp.sum(vec[1:2, :], axis=1, keepdims=True)       # [1, 1]
    sk = jnp.sum(vec[2:3, :], axis=1, keepdims=True)       # [1, 1]
    scale = lax.rsqrt(sq) * lax.rsqrt(sk)
    n_f = float(n_actual)

    attn = _attention_from_stats(q, v, kv_ref[...], ksum, scale, n_f,
                                 num_heads, head_dim, use_bf16)
    y = alpha * attn + (1.0 - alpha) * x                   # residual
    o_ref[...] = _layernorm(y, g_ref[...], be_ref[...], eps).astype(o_ref.dtype)


# ----------------------------- wrappers -----------------------------

def _pad_rows(x, n_pad):
    n = x.shape[0]
    if n_pad == n:
        return x
    return jnp.pad(x, ((0, n_pad - n), (0, 0)))


def fused_forward(x, w0, b0, wqkv, bqkv, gammas, betas, *, num_layers, num_heads,
                  head_dim, alpha, eps, use_bf16):
    n, f_in = x.shape
    hidden = w0.shape[1]
    hc = num_heads * head_dim
    kern = functools.partial(
        fused_forward_kernel, num_layers=num_layers, num_heads=num_heads,
        head_dim=head_dim, alpha=alpha, eps=eps, use_bf16=use_bf16)
    flops = 2 * n * f_in * hidden + num_layers * (
        2 * n * hidden * 3 * hc + 4 * n * hc * head_dim)
    bytes_acc = 4 * (n * f_in + f_in * hidden + hidden
                     + num_layers * hidden * 3 * hc + num_layers * 3 * hc
                     + 2 * (num_layers + 1) * hidden + n * hidden)
    cost = pl.CostEstimate(flops=int(flops),
                           transcendentals=int(4 * n * (num_layers + 1)),
                           bytes_accessed=int(bytes_acc))
    return pl.pallas_call(
        kern,
        out_shape=jax.ShapeDtypeStruct((n, hidden), jnp.float32),
        grid=(1,),
        in_specs=[
            pl.BlockSpec((n, f_in), lambda i: (0, 0)),
            pl.BlockSpec((f_in, hidden), lambda i: (0, 0)),
            pl.BlockSpec((1, hidden), lambda i: (0, 0)),
            pl.BlockSpec((num_layers, hidden, 3 * hc), lambda i: (0, 0, 0)),
            pl.BlockSpec((num_layers, 1, 3 * hc), lambda i: (0, 0, 0)),
            pl.BlockSpec((num_layers + 1, 1, hidden), lambda i: (0, 0, 0)),
            pl.BlockSpec((num_layers + 1, 1, hidden), lambda i: (0, 0, 0)),
        ],
        out_specs=pl.BlockSpec((n, hidden), lambda i: (0, 0)),
        compiler_params=_compiler_params(("arbitrary",)),
        cost_estimate=cost,
    )(x, w0, b0, wqkv, bqkv, gammas, betas)


def embed_forward(x, w, b, gamma, beta, *, tile_n, eps, use_bf16):
    n_pad, f_in = x.shape
    hidden = w.shape[1]
    kern = functools.partial(embed_kernel, eps=eps, use_bf16=use_bf16)
    cost = pl.CostEstimate(
        flops=int(2 * n_pad * f_in * hidden),
        transcendentals=int(n_pad),
        bytes_accessed=int(4 * (n_pad * f_in + f_in * hidden + 3 * hidden
                                + n_pad * hidden)))
    return pl.pallas_call(
        kern,
        out_shape=jax.ShapeDtypeStruct((n_pad, hidden), jnp.float32),
        grid=(n_pad // tile_n,),
        in_specs=[
            pl.BlockSpec((tile_n, f_in), lambda i: (i, 0)),
            pl.BlockSpec((f_in, hidden), lambda i: (0, 0)),
            pl.BlockSpec((1, hidden), lambda i: (0, 0)),
            pl.BlockSpec((1, hidden), lambda i: (0, 0)),
            pl.BlockSpec((1, hidden), lambda i: (0, 0)),
        ],
        out_specs=pl.BlockSpec((tile_n, hidden), lambda i: (i, 0)),
        compiler_params=_compiler_params(("parallel",)),
        cost_estimate=cost,
    )(x, w, b, gamma, beta)


def layer_stats(h, w_qkv, b_qkv, *, num_heads, head_dim, n_actual, tile_n, use_bf16):
    n_pad, hidden = h.shape
    hc = num_heads * head_dim
    masked = n_pad != n_actual
    kern = functools.partial(stats_kernel, num_heads=num_heads, head_dim=head_dim,
                             n_actual=n_actual, masked=masked, use_bf16=use_bf16)
    cost = pl.CostEstimate(
        flops=int(2 * n_pad * hidden * 3 * hc + 2 * n_pad * hc * head_dim),
        transcendentals=0,
        bytes_accessed=int(4 * (n_pad * hidden + hidden * 3 * hc + 3 * hc
                                + head_dim * hc + 3 * hc)))
    return pl.pallas_call(
        kern,
        out_shape=(
            jax.ShapeDtypeStruct((head_dim, hc), jnp.float32),   # sum_l k^T v
            jax.ShapeDtypeStruct((3, hc), jnp.float32),          # ksum | q^2 cols | k^2 cols
        ),
        grid=(n_pad // tile_n,),
        in_specs=[
            pl.BlockSpec((tile_n, hidden), lambda i: (i, 0)),
            pl.BlockSpec((hidden, 3 * hc), lambda i: (0, 0)),
            pl.BlockSpec((1, 3 * hc), lambda i: (0, 0)),
        ],
        out_specs=(
            pl.BlockSpec((head_dim, hc), lambda i: (0, 0)),
            pl.BlockSpec((3, hc), lambda i: (0, 0)),
        ),
        compiler_params=_compiler_params(("arbitrary",)),
        cost_estimate=cost,
    )(h, w_qkv, b_qkv)


def layer_apply(h, w_qkv, b_qkv, kv, vec, gamma, beta, *, num_heads, head_dim,
                n_actual, alpha, eps, tile_n, use_bf16):
    n_pad, hidden = h.shape
    hc = num_heads * head_dim
    kern = functools.partial(apply_kernel, num_heads=num_heads, head_dim=head_dim,
                             n_actual=n_actual, alpha=alpha, eps=eps,
                             use_bf16=use_bf16)
    cost = pl.CostEstimate(
        flops=int(2 * n_pad * hidden * 3 * hc + 2 * n_pad * hc * head_dim
                  + 12 * n_pad * hidden),
        transcendentals=int(3 * n_pad),
        bytes_accessed=int(4 * (2 * n_pad * hidden + hidden * 3 * hc + 3 * hc
                                + head_dim * hc + 3 * hc + 2 * hidden)))
    return pl.pallas_call(
        kern,
        out_shape=jax.ShapeDtypeStruct((n_pad, hidden), jnp.float32),
        grid=(n_pad // tile_n,),
        in_specs=[
            pl.BlockSpec((tile_n, hidden), lambda i: (i, 0)),
            pl.BlockSpec((hidden, 3 * hc), lambda i: (0, 0)),
            pl.BlockSpec((1, 3 * hc), lambda i: (0, 0)),
            pl.BlockSpec((head_dim, hc), lambda i: (0, 0)),
            pl.BlockSpec((3, hc), lambda i: (0, 0)),
            pl.BlockSpec((1, hidden), lambda i: (0, 0)),
            pl.BlockSpec((1, hidden), lambda i: (0, 0)),
        ],
        out_specs=pl.BlockSpec((tile_n, hidden), lambda i: (i, 0)),
        compiler_params=_compiler_params(("parallel",)),
        cost_estimate=cost,
    )(h, w_qkv, b_qkv, kv, vec, gamma, beta)


def trans_conv_forward(x, params, *, num_heads, alpha, eps=1e-5, use_bf16=False,
                       max_tile_n=_DEFAULT_MAX_TILE_N):
    n = x.shape[0]
    w0, b0 = params["fc0"]
    hidden = w0.shape[1]
    head_dim = hidden          # TransConvLayer(out_channels=hidden_channels)
    hc = num_heads * head_dim
    num_layers = len(params["convs"])

    # --- fully fused single-tile path: the whole forward in one pallas_call ---
    fused_bytes = 4 * (x.size + w0.size + num_layers * hidden * 3 * hc
                       + num_layers * 3 * hc + 2 * (num_layers + 1) * hidden
                       + 8 * n * max(hidden, 3 * hc))
    if n <= max_tile_n and fused_bytes < _VMEM_LIMIT // 2:
        wqkv = jnp.stack([c["W_qkv"][0] for c in params["convs"]], axis=0)
        bqkv = jnp.stack([c["W_qkv"][1] for c in params["convs"]], axis=0)
        gammas = jnp.stack([g for (g, _) in params["bns"]], axis=0)
        betas = jnp.stack([b for (_, b) in params["bns"]], axis=0)
        return fused_forward(x, w0, b0, wqkv, bqkv, gammas, betas,
                             num_layers=num_layers, num_heads=num_heads,
                             head_dim=head_dim, alpha=alpha, eps=eps,
                             use_bf16=use_bf16)

    # --- tiled two-pass path ---
    tile_n = max_tile_n
    n_pad = ((n + tile_n - 1) // tile_n) * tile_n
    xp = _pad_rows(x, n_pad)
    g0, be0 = params["bns"][0]
    h = embed_forward(xp, w0, b0, g0, be0, tile_n=tile_n, eps=eps, use_bf16=use_bf16)

    for i, conv in enumerate(params["convs"]):
        w_qkv, b_qkv = conv["W_qkv"]
        kv, vec = layer_stats(h, w_qkv, b_qkv, num_heads=num_heads,
                              head_dim=head_dim, n_actual=n, tile_n=tile_n,
                              use_bf16=use_bf16)
        gamma, beta = params["bns"][i + 1]
        h = layer_apply(h, w_qkv, b_qkv, kv, vec, gamma, beta,
                        num_heads=num_heads, head_dim=head_dim, n_actual=n,
                        alpha=alpha, eps=eps, tile_n=tile_n, use_bf16=use_bf16)
    return h[:n]


# ----------------------------- params & reference -----------------------------

def init_linear(key, fan_in, fan_out):
    kw, kb = jax.random.split(key)
    bound = 1.0 / math.sqrt(fan_in)
    w = jax.random.uniform(kw, (fan_in, fan_out), jnp.float32, -bound, bound)
    b = jax.random.uniform(kb, (1, fan_out), jnp.float32, -bound, bound)
    return w, b


def init_params(key, in_channels, hidden, num_layers, num_heads):
    keys = jax.random.split(key, 1 + 3 * num_layers)
    params = {
        "fc0": init_linear(keys[0], in_channels, hidden),
        "bns": [(jnp.ones((1, hidden), jnp.float32),
                 jnp.zeros((1, hidden), jnp.float32))
                for _ in range(num_layers + 1)],
        "convs": [],
    }
    for i in range(num_layers):
        base = 1 + 3 * i
        wq, bq = init_linear(keys[base + 0], hidden, hidden * num_heads)
        wk, bk = init_linear(keys[base + 1], hidden, hidden * num_heads)
        wv, bv = init_linear(keys[base + 2], hidden, hidden * num_heads)
        params["convs"].append({
            "W_qkv": (jnp.concatenate([wq, wk, wv], axis=1),   # fused Q|K|V
                      jnp.concatenate([bq, bk, bv], axis=1)),
            "separate": ((wq, bq), (wk, bk), (wv, bv)),        # for reference check
        })
    return params


def reference_forward(x, params, *, num_heads, alpha, eps=1e-5):
    # Pure-JAX mirror of the PyTorch module (eval mode).
    def ln(v, g, b):
        mu = jnp.mean(v, axis=-1, keepdims=True)
        var = jnp.mean((v - mu) ** 2, axis=-1, keepdims=True)
        return (v - mu) / jnp.sqrt(var + eps) * g + b

    n = x.shape[0]
    w0, b0 = params["fc0"]
    g0, be0 = params["bns"][0]
    h = jnp.maximum(ln(x @ w0 + b0, g0, be0), 0.0)
    prev = h
    for i, conv in enumerate(params["convs"]):
        (wq, bq), (wk, bk), (wv, bv) = conv["separate"]
        c = wq.shape[1] // num_heads
        q = (h @ wq + bq).reshape(n, num_heads, c)
        k = (h @ wk + bk).reshape(n, num_heads, c)
        v = (h @ wv + bv).reshape(n, num_heads, c)
        q = q / jnp.sqrt(jnp.sum(q * q))
        k = k / jnp.sqrt(jnp.sum(k * k))
        kv = jnp.einsum('lhm,lhd->hmd', k, v)
        num = jnp.einsum('nhm,hmd->nhd', q, kv) + n * v
        ksum = jnp.sum(k, axis=0)
        denom = jnp.einsum('nhm,hm->nh', q, ksum)[..., None] + n
        attn = (num / denom).mean(axis=1)
        g, be = params["bns"][i + 1]
        h = ln(alpha * attn + (1.0 - alpha) * prev, g, be)
        prev = h
    return h


if __name__ == "__main__":
    IN_CHANNELS = 16
    HIDDEN = 32
    NUM_LAYERS = 2
    NUM_HEADS = 1
    ALPHA = 0.5

    root = jax.random.PRNGKey(0)
    k_params, k_x1, k_x2 = jax.random.split(root, 3)
    params = init_params(k_params, IN_CHANNELS, HIDDEN, NUM_LAYERS, NUM_HEADS)

    # --- test 1: small graph -> fully fused single-kernel path ---
    N1 = 8
    x1 = jax.random.normal(k_x1, (N1, IN_CHANNELS), jnp.float32)
    fwd_fused = jax.jit(functools.partial(
        trans_conv_forward, num_heads=NUM_HEADS, alpha=ALPHA))
    out1 = jax.block_until_ready(fwd_fused(x1, params))
    assert out1.shape == (N1, HIDDEN)
    ref1 = jax.block_until_ready(
        reference_forward(x1, params, num_heads=NUM_HEADS, alpha=ALPHA))
    err1 = float(jnp.max(jnp.abs(out1 - ref1)))
    assert err1 < 2e-2, f"fused-path mismatch: max abs err {err1}"

    # --- test 2: force the tiled two-pass path (multi-tile grid + row masking) ---
    N2 = 20
    x2 = jax.random.normal(k_x2, (N2, IN_CHANNELS), jnp.float32)
    fwd_tiled = jax.jit(functools.partial(
        trans_conv_forward, num_heads=NUM_HEADS, alpha=ALPHA, max_tile_n=8))
    out2 = jax.block_until_ready(fwd_tiled(x2, params))
    assert out2.shape == (N2, HIDDEN)
    ref2 = jax.block_until_ready(
        reference_forward(x2, params, num_heads=NUM_HEADS, alpha=ALPHA))
    err2 = float(jnp.max(jnp.abs(out2 - ref2)))
    assert err2 < 2e-2, f"tiled-path mismatch: max abs err {err2}"

    print("KERNEL_OK")
</pallas_src>

<mosaic_0001>
module attributes {stable_mosaic.version = 11 : i64} {
  func.func @fused_forward_kernel(%arg0: i32, %arg1: memref<8x16xf32, #tpu.memory_space<vmem>>, %arg2: memref<16x32xf32, #tpu.memory_space<vmem>>, %arg3: memref<1x32xf32, #tpu.memory_space<vmem>>, %arg4: memref<2x32x96xf32, #tpu.memory_space<vmem>>, %arg5: memref<2x1x96xf32, #tpu.memory_space<vmem>>, %arg6: memref<3x1x32xf32, #tpu.memory_space<vmem>>, %arg7: memref<3x1x32xf32, #tpu.memory_space<vmem>>, %arg8: memref<8x32xf32, #tpu.memory_space<vmem>>) attributes {dimension_semantics = [#tpu.dimension_semantics<arbitrary>], iteration_bounds = array<i64: 1>, scalar_prefetch = 0 : i64, scratch_operands = 0 : i64, tpu.core_type = #tpu.core_type<tc>, window_params = [{pipeline_mode = #tpu.pipeline_mode<synchronous>, transform_indices = @transform_0, window_bounds = array<i64: 8, 16>}, {pipeline_mode = #tpu.pipeline_mode<synchronous>, transform_indices = @transform_1, window_bounds = array<i64: 16, 32>}, {pipeline_mode = #tpu.pipeline_mode<synchronous>, transform_indices = @transform_2, window_bounds = array<i64: 1, 32>}, {pipeline_mode = #tpu.pipeline_mode<synchronous>, transform_indices = @transform_3, window_bounds = array<i64: 2, 32, 96>}, {pipeline_mode = #tpu.pipeline_mode<synchronous>, transform_indices = @transform_4, window_bounds = array<i64: 2, 1, 96>}, {pipeline_mode = #tpu.pipeline_mode<synchronous>, transform_indices = @transform_5, window_bounds = array<i64: 3, 1, 32>}, {pipeline_mode = #tpu.pipeline_mode<synchronous>, transform_indices = @transform_6, window_bounds = array<i64: 3, 1, 32>}, {pipeline_mode = #tpu.pipeline_mode<synchronous>, transform_indices = @transform_7, window_bounds = array<i64: 8, 32>}]} {
    %c0 = arith.constant 0 : index
    %c0_0 = arith.constant 0 : index
    %0 = vector.load %arg1[%c0, %c0_0] : memref<8x16xf32, #tpu.memory_space<vmem>>, vector<8x16xf32>
    %c0_1 = arith.constant 0 : index
    %c0_2 = arith.constant 0 : index
    %1 = vector.load %arg2[%c0_1, %c0_2] : memref<16x32xf32, #tpu.memory_space<vmem>>, vector<16x32xf32>
    %cst = arith.constant dense<0.000000e+00> : vector<8x32xf32>
    %2 = tpu.matmul %0, %1, %cst {dimension_numbers = #tpu.dot_dimension_numbers<[1], [0], [0], [1], [0, 0, 1, 1], [], []>} : vector<8x16xf32>, vector<16x32xf32>, vector<8x32xf32> -> vector<8x32xf32>
    %c0_3 = arith.constant 0 : index
    %c0_4 = arith.constant 0 : index
    %3 = vector.load %arg3[%c0_3, %c0_4] : memref<1x32xf32, #tpu.memory_space<vmem>>, vector<1x32xf32>
    %4 = vector.broadcast %3 : vector<1x32xf32> to vector<8x32xf32>
    %5 = arith.addf %2, %4 : vector<8x32xf32>
    %c0_5 = arith.constant 0 : index
    %c0_6 = arith.constant 0 : index
    %c0_7 = arith.constant 0 : index
    %6 = vector.load %arg6[%c0_5, %c0_6, %c0_7] : memref<3x1x32xf32, #tpu.memory_space<vmem>>, vector<1x1x32xf32>
    %7 = vector.shape_cast %6 : vector<1x1x32xf32> to vector<1x32xf32>
    %c0_8 = arith.constant 0 : index
    %c0_9 = arith.constant 0 : index
    %c0_10 = arith.constant 0 : index
    %8 = vector.load %arg7[%c0_8, %c0_9, %c0_10] : memref<3x1x32xf32, #tpu.memory_space<vmem>>, vector<1x1x32xf32>
    %9 = vector.shape_cast %8 : vector<1x1x32xf32> to vector<1x32xf32>
    %cst_11 = arith.constant dense<0.000000e+00> : vector<8xf32>
    %10 = vector.multi_reduction <add>, %5, %cst_11 [1] : vector<8x32xf32> to vector<8xf32>
    %11 = vector.shape_cast %10 : vector<8xf32> to vector<8x1xf32>
    %cst_12 = arith.constant 3.200000e+01 : f32
    %12 = vector.broadcast %cst_12 : f32 to vector<8x1xf32>
    %13 = arith.divf %11, %12 : vector<8x1xf32>
    %14 = vector.broadcast %13 : vector<8x1xf32> to vector<8x32xf32>
    %15 = arith.subf %5, %14 : vector<8x32xf32>
    %16 = arith.mulf %15, %15 : vector<8x32xf32>
    %cst_13 = arith.constant dense<0.000000e+00> : vector<8xf32>
    %17 = vector.multi_reduction <add>, %16, %cst_13 [1] : vector<8x32xf32> to vector<8xf32>
    %18 = vector.shape_cast %17 : vector<8xf32> to vector<8x1xf32>
    %cst_14 = arith.constant 3.200000e+01 : f32
    %19 = vector.broadcast %cst_14 : f32 to vector<8x1xf32>
    %20 = arith.divf %18, %19 : vector<8x1xf32>
    %21 = vector.broadcast %13 : vector<8x1xf32> to vector<8x32xf32>
    %22 = arith.subf %5, %21 : vector<8x32xf32>
    %cst_15 = arith.constant 9.99999974E-6 : f32
    %23 = vector.broadcast %cst_15 : f32 to vector<8x1xf32>
    %24 = arith.addf %20, %23 : vector<8x1xf32>
    %25 = math.rsqrt %24 : vector<8x1xf32>
    %26 = vector.broadcast %25 : vector<8x1xf32> to vector<8x32xf32>
    %27 = arith.mulf %22, %26 : vector<8x32xf32>
    %28 = vector.broadcast %7 : vector<1x32xf32> to vector<8x32xf32>
    %29 = arith.mulf %27, %28 : vector<8x32xf32>
    %30 = vector.broadcast %9 : vector<1x32xf32> to vector<8x32xf32>
    %31 = arith.addf %29, %30 : vector<8x32xf32>
    %cst_16 = arith.constant 0.000000e+00 : f32
    %32 = vector.broadcast %cst_16 : f32 to vector<8x32xf32>
    %33 = arith.maximumf %31, %32 : vector<8x32xf32>
    %c0_17 = arith.constant 0 : index
    %c0_18 = arith.constant 0 : index
    %c0_19 = arith.constant 0 : index
    %34 = vector.load %arg4[%c0_17, %c0_18, %c0_19] : memref<2x32x96xf32, #tpu.memory_space<vmem>>, vector<1x32x96xf32>
    %35 = vector.shape_cast %34 : vector<1x32x96xf32> to vector<32x96xf32>
    %c0_20 = arith.constant 0 : index
    %c0_21 = arith.constant 0 : index
    %c0_22 = arith.constant 0 : index
    %36 = vector.load %arg5[%c0_20, %c0_21, %c0_22] : memref<2x1x96xf32, #tpu.memory_space<vmem>>, vector<1x1x96xf32>
    %37 = vector.shape_cast %36 : vector<1x1x96xf32> to vector<1x96xf32>
    %cst_23 = arith.constant dense<0.000000e+00> : vector<8x96xf32>
    %38 = tpu.matmul %33, %35, %cst_23 {dimension_numbers = #tpu.dot_dimension_numbers<[1], [0], [0], [1], [0, 0, 1, 1], [], []>} : vector<8x32xf32>, vector<32x96xf32>, vector<8x96xf32> -> vector<8x96xf32>
    %39 = vector.broadcast %37 : vector<1x96xf32> to vector<8x96xf32>
    %40 = arith.addf %38, %39 : vector<8x96xf32>
    %41 = vector.extract_strided_slice %40 {offsets = [0, 0], sizes = [8, 32], strides = [1, 1]} : vector<8x96xf32> to vector<8x32xf32>
    %42 = vector.extract_strided_slice %40 {offsets = [0, 32], sizes = [8, 32], strides = [1, 1]} : vector<8x96xf32> to vector<8x32xf32>
    %43 = vector.extract_strided_slice %40 {offsets = [0, 64], sizes = [8, 32], strides = [1, 1]} : vector<8x96xf32> to vector<8x32xf32>
    %44 = arith.mulf %41, %41 : vector<8x32xf32>
    %cst_24 = arith.constant dense<0.000000e+00> : vector<32xf32>
    %45 = vector.multi_reduction <add>, %44, %cst_24 [0] : vector<8x32xf32> to vector<32xf32>
    %46 = vector.shape_cast %45 : vector<32xf32> to vector<1x32xf32>
    %cst_25 = arith.constant dense<0.000000e+00> : vector<1xf32>
    %47 = vector.multi_reduction <add>, %46, %cst_25 [1] : vector<1x32xf32> to vector<1xf32>
    %48 = vector.shape_cast %47 : vector<1xf32> to vector<1x1xf32>
    %49 = arith.mulf %42, %42 : vector<8x32xf32>
    %cst_26 = arith.constant dense<0.000000e+00> : vector<32xf32>
    %50 = vector.multi_reduction <add>, %49, %cst_26 [0] : vector<8x32xf32> to vector<32xf32>
    %51 = vector.shape_cast %50 : vector<32xf32> to vector<1x32xf32>
    %cst_27 = arith.constant dense<0.000000e+00> : vector<1xf32>
    %52 = vector.multi_reduction <add>, %51, %cst_27 [1] : vector<1x32xf32> to vector<1xf32>
    %53 = vector.shape_cast %52 : vector<1xf32> to vector<1x1xf32>
    %54 = math.rsqrt %48 : vector<1x1xf32>
    %55 = math.rsqrt %53 : vector<1x1xf32>
    %56 = arith.mulf %54, %55 : vector<1x1xf32>
    %cst_28 = arith.constant dense<0.000000e+00> : vector<32xf32>
    %57 = vector.multi_reduction <add>, %42, %cst_28 [0] : vector<8x32xf32> to vector<32xf32>
    %58 = vector.shape_cast %57 : vector<32xf32> to vector<1x32xf32>
    %cst_29 = arith.constant dense<0.000000e+00> : vector<32x32xf32>
    %59 = tpu.matmul %42, %43, %cst_29 {dimension_numbers = #tpu.dot_dimension_numbers<[0], [0], [1], [1], [0, 1, 1, 1], [], []>} : vector<8x32xf32>, vector<8x32xf32>, vector<32x32xf32> -> vector<32x32xf32>
    %cst_30 = arith.constant dense<0.000000e+00> : vector<8x32xf32>
    %60 = tpu.matmul %41, %59, %cst_30 {dimension_numbers = #tpu.dot_dimension_numbers<[1], [0], [0], [1], [0, 0, 1, 1], [], []>} : vector<8x32xf32>, vector<32x32xf32>, vector<8x32xf32> -> vector<8x32xf32>
    %61 = vector.broadcast %56 : vector<1x1xf32> to vector<8x32xf32>
    %62 = arith.mulf %60, %61 : vector<8x32xf32>
    %cst_31 = arith.constant 8.000000e+00 : f32
    %63 = vector.broadcast %cst_31 : f32 to vector<8x32xf32>
    %64 = arith.mulf %63, %43 : vector<8x32xf32>
    %65 = arith.addf %62, %64 : vector<8x32xf32>
    %66 = vector.broadcast %58 : vector<1x32xf32> to vector<8x32xf32>
    %67 = arith.mulf %41, %66 : vector<8x32xf32>
    %cst_32 = arith.constant dense<0.000000e+00> : vector<8xf32>
    %68 = vector.multi_reduction <add>, %67, %cst_32 [1] : vector<8x32xf32> to vector<8xf32>
    %69 = vector.shape_cast %68 : vector<8xf32> to vector<8x1xf32>
    %70 = vector.broadcast %56 : vector<1x1xf32> to vector<8x1xf32>
    %71 = arith.mulf %69, %70 : vector<8x1xf32>
    %cst_33 = arith.constant 8.000000e+00 : f32
    %72 = vector.broadcast %cst_33 : f32 to vector<8x1xf32>
    %73 = arith.addf %71, %72 : vector<8x1xf32>
    %74 = tpu.reciprocal %73 : vector<8x1xf32> -> vector<8x1xf32>
    %75 = vector.broadcast %74 : vector<8x1xf32> to vector<8x32xf32>
    %76 = arith.mulf %65, %75 : vector<8x32xf32>
    %cst_34 = arith.constant 1.000000e+00 : f32
    %77 = vector.broadcast %cst_34 : f32 to vector<8x32xf32>
    %78 = arith.mulf %76, %77 : vector<8x32xf32>
    %cst_35 = arith.constant 5.000000e-01 : f32
    %79 = vector.broadcast %cst_35 : f32 to vector<8x32xf32>
    %80 = arith.mulf %79, %78 : vector<8x32xf32>
    %cst_36 = arith.constant 5.000000e-01 : f32
    %81 = vector.broadcast %cst_36 : f32 to vector<8x32xf32>
    %82 = arith.mulf %81, %33 : vector<8x32xf32>
    %83 = arith.addf %80, %82 : vector<8x32xf32>
    %c1 = arith.constant 1 : index
    %c0_37 = arith.constant 0 : index
    %c0_38 = arith.constant 0 : index
    %84 = vector.load %arg6[%c1, %c0_37, %c0_38] : memref<3x1x32xf32, #tpu.memory_space<vmem>>, vector<1x1x32xf32>
    %85 = vector.shape_cast %84 : vector<1x1x32xf32> to vector<1x32xf32>
    %c1_39 = arith.constant 1 : index
    %c0_40 = arith.constant 0 : index
    %c0_41 = arith.constant 0 : index
    %86 = vector.load %arg7[%c1_39, %c0_40, %c0_41] : memref<3x1x32xf32, #tpu.memory_space<vmem>>, vector<1x1x32xf32>
    %87 = vector.shape_cast %86 : vector<1x1x32xf32> to vector<1x32xf32>
    %cst_42 = arith.constant dense<0.000000e+00> : vector<8xf32>
    %88 = vector.multi_reduction <add>, %83, %cst_42 [1] : vector<8x32xf32> to vector<8xf32>
    %89 = vector.shape_cast %88 : vector<8xf32> to vector<8x1xf32>
    %cst_43 = arith.constant 3.200000e+01 : f32
    %90 = vector.broadcast %cst_43 : f32 to vector<8x1xf32>
    %91 = arith.divf %89, %90 : vector<8x1xf32>
    %92 = vector.broadcast %91 : vector<8x1xf32> to vector<8x32xf32>
    %93 = arith.subf %83, %92 : vector<8x32xf32>
    %94 = arith.mulf %93, %93 : vector<8x32xf32>
    %cst_44 = arith.constant dense<0.000000e+00> : vector<8xf32>
    %95 = vector.multi_reduction <add>, %94, %cst_44 [1] : vector<8x32xf32> to vector<8xf32>
    %96 = vector.shape_cast %95 : vector<8xf32> to vector<8x1xf32>
    %cst_45 = arith.constant 3.200000e+01 : f32
    %97 = vector.broadcast %cst_45 : f32 to vector<8x1xf32>
    %98 = arith.divf %96, %97 : vector<8x1xf32>
    %99 = vector.broadcast %91 : vector<8x1xf32> to vector<8x32xf32>
    %100 = arith.subf %83, %99 : vector<8x32xf32>
    %cst_46 = arith.constant 9.99999974E-6 : f32
    %101 = vector.broadcast %cst_46 : f32 to vector<8x1xf32>
    %102 = arith.addf %98, %101 : vector<8x1xf32>
    %103 = math.rsqrt %102 : vector<8x1xf32>
    %104 = vector.broadcast %103 : vector<8x1xf32> to vector<8x32xf32>
    %105 = arith.mulf %100, %104 : vector<8x32xf32>
    %106 = vector.broadcast %85 : vector<1x32xf32> to vector<8x32xf32>
    %107 = arith.mulf %105, %106 : vector<8x32xf32>
    %108 = vector.broadcast %87 : vector<1x32xf32> to vector<8x32xf32>
    %109 = arith.addf %107, %108 : vector<8x32xf32>
    %c1_47 = arith.constant 1 : index
    %c0_48 = arith.constant 0 : index
    %c0_49 = arith.constant 0 : index
    %110 = vector.load %arg4[%c1_47, %c0_48, %c0_49] : memref<2x32x96xf32, #tpu.memory_space<vmem>>, vector<1x32x96xf32>
    %111 = vector.shape_cast %110 : vector<1x32x96xf32> to vector<32x96xf32>
    %c1_50 = arith.constant 1 : index
    %c0_51 = arith.constant 0 : index
    %c0_52 = arith.constant 0 : index
    %112 = vector.load %arg5[%c1_50, %c0_51, %c0_52] : memref<2x1x96xf32, #tpu.memory_space<vmem>>, vector<1x1x96xf32>
    %113 = vector.shape_cast %112 : vector<1x1x96xf32> to vector<1x96xf32>
    %cst_53 = arith.constant dense<0.000000e+00> : vector<8x96xf32>
    %114 = tpu.matmul %109, %111, %cst_53 {dimension_numbers = #tpu.dot_dimension_numbers<[1], [0], [0], [1], [0, 0, 1, 1], [], []>} : vector<8x32xf32>, vector<32x96xf32>, vector<8x96xf32> -> vector<8x96xf32>
    %115 = vector.broadcast %113 : vector<1x96xf32> to vector<8x96xf32>
    %116 = arith.addf %114, %115 : vector<8x96xf32>
    %117 = vector.extract_strided_slice %116 {offsets = [0, 0], sizes = [8, 32], strides = [1, 1]} : vector<8x96xf32> to vector<8x32xf32>
    %118 = vector.extract_strided_slice %116 {offsets = [0, 32], sizes = [8, 32], strides = [1, 1]} : vector<8x96xf32> to vector<8x32xf32>
    %119 = vector.extract_strided_slice %116 {offsets = [0, 64], sizes = [8, 32], strides = [1, 1]} : vector<8x96xf32> to vector<8x32xf32>
    %120 = arith.mulf %117, %117 : vector<8x32xf32>
    %cst_54 = arith.constant dense<0.000000e+00> : vector<32xf32>
    %121 = vector.multi_reduction <add>, %120, %cst_54 [0] : vector<8x32xf32> to vector<32xf32>
    %122 = vector.shape_cast %121 : vector<32xf32> to vector<1x32xf32>
    %cst_55 = arith.constant dense<0.000000e+00> : vector<1xf32>
    %123 = vector.multi_reduction <add>, %122, %cst_55 [1] : vector<1x32xf32> to vector<1xf32>
    %124 = vector.shape_cast %123 : vector<1xf32> to vector<1x1xf32>
    %125 = arith.mulf %118, %118 : vector<8x32xf32>
    %cst_56 = arith.constant dense<0.000000e+00> : vector<32xf32>
    %126 = vector.multi_reduction <add>, %125, %cst_56 [0] : vector<8x32xf32> to vector<32xf32>
    %127 = vector.shape_cast %126 : vector<32xf32> to vector<1x32xf32>
    %cst_57 = arith.constant dense<0.000000e+00> : vector<1xf32>
    %128 = vector.multi_reduction <add>, %127, %cst_57 [1] : vector<1x32xf32> to vector<1xf32>
    %129 = vector.shape_cast %128 : vector<1xf32> to vector<1x1xf32>
    %130 = math.rsqrt %124 : vector<1x1xf32>
    %131 = math.rsqrt %129 : vector<1x1xf32>
    %132 = arith.mulf %130, %131 : vector<1x1xf32>
    %cst_58 = arith.constant dense<0.000000e+00> : vector<32xf32>
    %133 = vector.multi_reduction <add>, %118, %cst_58 [0] : vector<8x32xf32> to vector<32xf32>
    %134 = vector.shape_cast %133 : vector<32xf32> to vector<1x32xf32>
    %cst_59 = arith.constant dense<0.000000e+00> : vector<32x32xf32>
    %135 = tpu.matmul %118, %119, %cst_59 {dimension_numbers = #tpu.dot_dimension_numbers<[0], [0], [1], [1], [0, 1, 1, 1], [], []>} : vector<8x32xf32>, vector<8x32xf32>, vector<32x32xf32> -> vector<32x32xf32>
    %cst_60 = arith.constant dense<0.000000e+00> : vector<8x32xf32>
    %136 = tpu.matmul %117, %135, %cst_60 {dimension_numbers = #tpu.dot_dimension_numbers<[1], [0], [0], [1], [0, 0, 1, 1], [], []>} : vector<8x32xf32>, vector<32x32xf32>, vector<8x32xf32> -> vector<8x32xf32>
    %137 = vector.broadcast %132 : vector<1x1xf32> to vector<8x32xf32>
    %138 = arith.mulf %136, %137 : vector<8x32xf32>
    %cst_61 = arith.constant 8.000000e+00 : f32
    %139 = vector.broadcast %cst_61 : f32 to vector<8x32xf32>
    %140 = arith.mulf %139, %119 : vector<8x32xf32>
    %141 = arith.addf %138, %140 : vector<8x32xf32>
    %142 = vector.broadcast %134 : vector<1x32xf32> to vector<8x32xf32>
    %143 = arith.mulf %117, %142 : vector<8x32xf32>
    %cst_62 = arith.constant dense<0.000000e+00> : vector<8xf32>
    %144 = vector.multi_reduction <add>, %143, %cst_62 [1] : vector<8x32xf32> to vector<8xf32>
    %145 = vector.shape_cast %144 : vector<8xf32> to vector<8x1xf32>
    %146 = vector.broadcast %132 : vector<1x1xf32> to vector<8x1xf32>
    %147 = arith.mulf %145, %146 : vector<8x1xf32>
    %cst_63 = arith.constant 8.000000e+00 : f32
    %148 = vector.broadcast %cst_63 : f32 to vector<8x1xf32>
    %149 = arith.addf %147, %148 : vector<8x1xf32>
    %150 = tpu.reciprocal %149 : vector<8x1xf32> -> vector<8x1xf32>
    %151 = vector.broadcast %150 : vector<8x1xf32> to vector<8x32xf32>
    %152 = arith.mulf %141, %151 : vector<8x32xf32>
    %cst_64 = arith.constant 1.000000e+00 : f32
    %153 = vector.broadcast %cst_64 : f32 to vector<8x32xf32>
    %154 = arith.mulf %152, %153 : vector<8x32xf32>
    %cst_65 = arith.constant 5.000000e-01 : f32
    %155 = vector.broadcast %cst_65 : f32 to vector<8x32xf32>
    %156 = arith.mulf %155, %154 : vector<8x32xf32>
    %cst_66 = arith.constant 5.000000e-01 : f32
    %157 = vector.broadcast %cst_66 : f32 to vector<8x32xf32>
    %158 = arith.mulf %157, %109 : vector<8x32xf32>
    %159 = arith.addf %156, %158 : vector<8x32xf32>
    %c2 = arith.constant 2 : index
    %c0_67 = arith.constant 0 : index
    %c0_68 = arith.constant 0 : index
    %160 = vector.load %arg6[%c2, %c0_67, %c0_68] : memref<3x1x32xf32, #tpu.memory_space<vmem>>, vector<1x1x32xf32>
    %161 = vector.shape_cast %160 : vector<1x1x32xf32> to vector<1x32xf32>
    %c2_69 = arith.constant 2 : index
    %c0_70 = arith.constant 0 : index
    %c0_71 = arith.constant 0 : index
    %162 = vector.load %arg7[%c2_69, %c0_70, %c0_71] : memref<3x1x32xf32, #tpu.memory_space<vmem>>, vector<1x1x32xf32>
    %163 = vector.shape_cast %162 : vector<1x1x32xf32> to vector<1x32xf32>
    %cst_72 = arith.constant dense<0.000000e+00> : vector<8xf32>
    %164 = vector.multi_reduction <add>, %159, %cst_72 [1] : vector<8x32xf32> to vector<8xf32>
    %165 = vector.shape_cast %164 : vector<8xf32> to vector<8x1xf32>
    %cst_73 = arith.constant 3.200000e+01 : f32
    %166 = vector.broadcast %cst_73 : f32 to vector<8x1xf32>
    %167 = arith.divf %165, %166 : vector<8x1xf32>
    %168 = vector.broadcast %167 : vector<8x1xf32> to vector<8x32xf32>
    %169 = arith.subf %159, %168 : vector<8x32xf32>
    %170 = arith.mulf %169, %169 : vector<8x32xf32>
    %cst_74 = arith.constant dense<0.000000e+00> : vector<8xf32>
    %171 = vector.multi_reduction <add>, %170, %cst_74 [1] : vector<8x32xf32> to vector<8xf32>
    %172 = vector.shape_cast %171 : vector<8xf32> to vector<8x1xf32>
    %cst_75 = arith.constant 3.200000e+01 : f32
    %173 = vector.broadcast %cst_75 : f32 to vector<8x1xf32>
    %174 = arith.divf %172, %173 : vector<8x1xf32>
    %175 = vector.broadcast %167 : vector<8x1xf32> to vector<8x32xf32>
    %176 = arith.subf %159, %175 : vector<8x32xf32>
    %cst_76 = arith.constant 9.99999974E-6 : f32
    %177 = vector.broadcast %cst_76 : f32 to vector<8x1xf32>
    %178 = arith.addf %174, %177 : vector<8x1xf32>
    %179 = math.rsqrt %178 : vector<8x1xf32>
    %180 = vector.broadcast %179 : vector<8x1xf32> to vector<8x32xf32>
    %181 = arith.mulf %176, %180 : vector<8x32xf32>
    %182 = vector.broadcast %161 : vector<1x32xf32> to vector<8x32xf32>
    %183 = arith.mulf %181, %182 : vector<8x32xf32>
    %184 = vector.broadcast %163 : vector<1x32xf32> to vector<8x32xf32>
    %185 = arith.addf %183, %184 : vector<8x32xf32>
    %c0_77 = arith.constant 0 : index
    %c0_78 = arith.constant 0 : index
    %186 = vector.load %arg8[%c0_77, %c0_78] : memref<8x32xf32, #tpu.memory_space<vmem>>, vector<8x32xf32>
    tpu.vector_store %arg8[%c0_77, %c0_78], %185 {strides = array<i32>} : memref<8x32xf32, #tpu.memory_space<vmem>>, vector<8x32xf32>,
    return
  }
  func.func @transform_0(%arg0: i32) -> (i32, i32) {
    %c0_i32 = arith.constant 0 : i32
    %c0_i32_0 = arith.constant 0 : i32
    %c0_i32_1 = arith.constant 0 : i32
    return %c0_i32, %c0_i32_0 : i32, i32
  }
  func.func @transform_1(%arg0: i32) -> (i32, i32) {
    %c0_i32 = arith.constant 0 : i32
    %c0_i32_0 = arith.constant 0 : i32
    %c0_i32_1 = arith.constant 0 : i32
    return %c0_i32, %c0_i32_0 : i32, i32
  }
  func.func @transform_2(%arg0: i32) -> (i32, i32) {
    %c0_i32 = arith.constant 0 : i32
    %c0_i32_0 = arith.constant 0 : i32
    %c0_i32_1 = arith.constant 0 : i32
    return %c0_i32, %c0_i32_0 : i32, i32
  }
  func.func @transform_3(%arg0: i32) -> (i32, i32, i32) {
    %c0_i32 = arith.constant 0 : i32
    %c0_i32_0 = arith.constant 0 : i32
    %c0_i32_1 = arith.constant 0 : i32
    %c0_i32_2 = arith.constant 0 : i32
    return %c0_i32, %c0_i32_0, %c0_i32_1 : i32, i32, i32
  }
  func.func @transform_4(%arg0: i32) -> (i32, i32, i32) {
    %c0_i32 = arith.constant 0 : i32
    %c0_i32_0 = arith.constant 0 : i32
    %c0_i32_1 = arith.constant 0 : i32
    %c0_i32_2 = arith.constant 0 : i32
    return %c0_i32, %c0_i32_0, %c0_i32_1 : i32, i32, i32
  }
  func.func @transform_5(%arg0: i32) -> (i32, i32, i32) {
    %c0_i32 = arith.constant 0 : i32
    %c0_i32_0 = arith.constant 0 : i32
    %c0_i32_1 = arith.constant 0 : i32
    %c0_i32_2 = arith.constant 0 : i32
    return %c0_i32, %c0_i32_0, %c0_i32_1 : i32, i32, i32
  }
  func.func @transform_6(%arg0: i32) -> (i32, i32, i32) {
    %c0_i32 = arith.constant 0 : i32
    %c0_i32_0 = arith.constant 0 : i32
    %c0_i32_1 = arith.constant 0 : i32
    %c0_i32_2 = arith.constant 0 : i32
    return %c0_i32, %c0_i32_0, %c0_i32_1 : i32, i32, i32
  }
  func.func @transform_7(%arg0: i32) -> (i32, i32) {
    %c0_i32 = arith.constant 0 : i32
    %c0_i32_0 = arith.constant 0 : i32
    %c0_i32_1 = arith.constant 0 : i32
    return %c0_i32, %c0_i32_0 : i32, i32
  }
}

</mosaic_0001>

<llo_original>
// kernel: trans_conv_forward.1
$region0: #{trans_conv_forward.1}
  #allocation0 [shape = 'u32[]', space=smem, size = 0x4, offset = 0x4, fixed_abs, tag = 'smem constant byte address 0x4 - core index']
  #allocation1 [shape = 'u32[144,128]{1,0:T(1,128)}', space=vmem, size = 0x12000, scoped, tag = 'internal scratch']
  %s0 = inlined_call_operand.vmem [shape: f32[8,16], index: 0, kind: input, shape index: {}]
  %s1 = inlined_call_operand.vmem [shape: f32[16,32], index: 1, kind: input, shape index: {}]
  %s2 = inlined_call_operand.vmem [shape: f32[1,32], index: 2, kind: input, shape index: {}]
  %s3 = inlined_call_operand.vmem [shape: f32[2,32,96], index: 3, kind: input, shape index: {}]
  %s4 = inlined_call_operand.vmem [shape: f32[2,1,96], index: 4, kind: input, shape index: {}]
  %s5 = inlined_call_operand.vmem [shape: f32[3,1,32], index: 5, kind: input, shape index: {}]
  %s6 = inlined_call_operand.vmem [shape: f32[3,1,32], index: 6, kind: input, shape index: {}]
  %s7 = inlined_call_operand.hbm [shape: f32[8,32], index: 7, kind: output, shape index: {}]
  %s8 = sld [smem:[#allocation0]]
  $region38: #{trans_conv_forward.1} parent=0
    _
  %s10 = ssub.s32 1, %s8
  %s11 = scalar_select 0, %s10, %s8
  $region1: #{trans_conv_forward.1} parent=0
    #allocation2 [shape = 'u8[4096]{0}', space=vmem, size = 0x1000, scoped, tag = 'output window, operand 0, single buffered']
    #allocation3 [shape = 's32[1]{0}', space=sflag, size = 0x4, scoped, tag = 'scoped memory for trans_conv_forward.1']
    %12 = vsyncpa [#allocation3], 0
    // Predicated region
    $region2: #{trans_conv_forward.1} parent=1 // pred_check
      _
    $region3: #{trans_conv_forward.1} parent=1 // pred_check_branch
      %14 = sbr.rel (0) target = $region5
    $region4: #{trans_conv_forward.1} parent=1 // pred_region
      _
    $region5: #{trans_conv_forward.1} parent=1 // pred_fallthru
      _
    // Predicated region
    $region6: #{trans_conv_forward.1} parent=1 // pred_check
      _
    $region7: #{trans_conv_forward.1} parent=1 // pred_check_branch
      %16 = sbr.rel (0) target = $region9
    $region8: #{trans_conv_forward.1} parent=1 // pred_region
      _
    $region9: #{trans_conv_forward.1} parent=1 // pred_fallthru
      _
    // Predicated region
    $region10: #{trans_conv_forward.1} parent=1 // pred_check
      _
    $region11: #{trans_conv_forward.1} parent=1 // pred_check_branch
      %18 = sbr.rel (0) target = $region13
    $region12: #{trans_conv_forward.1} parent=1 // pred_region
      _
    $region13: #{trans_conv_forward.1} parent=1 // pred_fallthru
      _
    // Predicated region
    $region14: #{trans_conv_forward.1} parent=1 // pred_check
      _
    $region15: #{trans_conv_forward.1} parent=1 // pred_check_branch
      %20 = sbr.rel (0) target = $region17
    $region16: #{trans_conv_forward.1} parent=1 // pred_region
      _
    $region17: #{trans_conv_forward.1} parent=1 // pred_fallthru
      _
    // Predicated region
    $region18: #{trans_conv_forward.1} parent=1 // pred_check
      _
    $region19: #{trans_conv_forward.1} parent=1 // pred_check_branch
      %22 = sbr.rel (0) target = $region21
    $region20: #{trans_conv_forward.1} parent=1 // pred_region
      _
    $region21: #{trans_conv_forward.1} parent=1 // pred_fallthru
      _
    // Predicated region
    $region22: #{trans_conv_forward.1} parent=1 // pred_check
      _
    $region23: #{trans_conv_forward.1} parent=1 // pred_check_branch
      %24 = sbr.rel (0) target = $region25
    $region24: #{trans_conv_forward.1} parent=1 // pred_region
      _
    $region25: #{trans_conv_forward.1} parent=1 // pred_fallthru
      _
    // Predicated region
    $region26: #{trans_conv_forward.1} parent=1 // pred_check
      _
    $region27: #{trans_conv_forward.1} parent=1 // pred_check_branch
      %26 = sbr.rel (0) target = $region29
    $region28: #{trans_conv_forward.1} parent=1 // pred_region
      _
    $region29: #{trans_conv_forward.1} parent=1 // pred_fallthru
      _
    %v27 = vld [vmem:[%s0] sm:$0xff]
    %v28 = vld [vmem:[%s1] sm:$0xff]
    %v29 = vld [vmem:[%s1 + $0x8] sm:$0xff]
    %v30 = vld [vmem:[%s2] sm:$0x1]
    %v32 = vlaneseq
    %v33 = vshrl.u32 %v32, 7
    %v34 = vsub.s32 0, %v33
    %v35 = vrot.slane %v30, %v34
    %vm37 = vcmask 130048
    %v39 = vsel %vm37, %v27, 0
    %41 = vmatprep.subr.mxu0 0.0
    %42 = vmatpush1.msra.mxu0 %v28
    %43 = vmatprep.subr.mxu0 0.0
    %44 = vmatpush1.msra.mxu0 %v29
    %45 = vmatprep.subr.mxu0 0.0
    %46 = vmatpush1.msra.mxu0 0.0
    %47 = vmatprep.subr.mxu0 0.0
    %48 = vmatpush1.msra.mxu0 0.0
    %49 = vmatprep.subr.mxu0 0.0
    %50 = vmatpush1.msra.mxu0 0.0
    %51 = vmatprep.subr.mxu0 0.0
    %52 = vmatpush1.msra.mxu0 0.0
    %53 = vmatprep.subr.mxu0 0.0
    %54 = vmatpush1.msra.mxu0 0.0
    %55 = vmatprep.subr.mxu0 0.0
    %56 = vmatpush1.msra.mxu0 0.0
    %57 = vmatprep.subr.mxu0 0.0
    %58 = vmatpush1.msra.mxu0 0.0
    %59 = vmatprep.subr.mxu0 0.0
    %60 = vmatpush1.msra.mxu0 0.0
    %61 = vmatprep.subr.mxu0 0.0
    %62 = vmatpush1.msra.mxu0 0.0
    %63 = vmatprep.subr.mxu0 0.0
    %64 = vmatpush1.msra.mxu0 0.0
    %65 = vmatprep.subr.mxu0 0.0
    %66 = vmatpush1.msra.mxu0 0.0
    %67 = vmatprep.subr.mxu0 0.0
    %68 = vmatpush1.msra.mxu0 0.0
    %69 = vmatprep.subr.mxu0 0.0
    %70 = vmatpush1.msra.mxu0 0.0
    %71 = vmatprep.subr.mxu0 0.0
    %72 = vmatpush1.msra.mxu0 0.0
    %73 = vmatprep.subr.mxu0 0.0
    %74 = vmatpush1.msra.mxu0 0.0
    %75 = vmatprep.subr.mxu0 0.0
    %76 = vmatpush1.msra.mxu0 0.0
    %77 = vmatprep.subr.mxu0 0.0
    %78 = vmatpush1.msra.mxu0 0.0
    %79 = vmatprep.subr.mxu0 0.0
    %80 = vmatpush1.msra.mxu0 0.0
    %81 = vmatprep.subr.mxu0 0.0
    %82 = vmatpush1.msra.mxu0 0.0
    %83 = vmatprep.subr.mxu0 0.0
    %84 = vmatpush1.msra.mxu0 0.0
    %85 = vmatprep.subr.mxu0 0.0
    %86 = vmatpush1.msra.mxu0 0.0
    %87 = vmatprep.subr.mxu0 0.0
    %88 = vmatpush1.msra.mxu0 0.0
    %89 = vmatprep.subr.mxu0 0.0
    %90 = vmatpush1.msra.mxu0 0.0
    %91 = vmatprep.subr.mxu0 0.0
    %92 = vmatpush1.msra.mxu0 0.0
    %93 = vmatprep.subr.mxu0 0.0
    %94 = vmatpush1.msra.mxu0 0.0
    %95 = vmatprep.subr.mxu0 0.0
    %96 = vmatpush1.msra.mxu0 0.0
    %97 = vmatprep.subr.mxu0 0.0
    %98 = vmatpush1.msra.mxu0 0.0
    %99 = vmatprep.subr.mxu0 0.0
    %100 = vmatpush1.msra.mxu0 0.0
    %101 = vmatprep.subr.mxu0 0.0
    %102 = vmatpush1.msra.mxu0 0.0
    %103 = vmatprep.subr.mxu0 0.0
    %104 = vmatpush1.msra.mxu0 0.0
    %105 = vmatprep.mubr.f32.mxu0 0.0
    %106 = vmatmul.mubr.f32.gmra.mrb[0].mxu0 %v39
    %v107 = vpop.f32.mrb[0].mxu0
    %v108 = vadd.f32 %v35, %v107
    %v109 = vpop.f32.mrb[0].mxu0
    %110 = vdwg.mxu0
    %v111 = vld [vmem:[%s5] sm:$0x1]
    %v112 = vld [vmem:[%s6] sm:$0x1]
    %vm113 = vcmask 261120
    %v114 = vsel %vm113, %v108, 0.0
    %115 = vadd.xlane.f32.xlu0 %v114
    %v116 = vpop.xlane.xlu0 %115
    %v117 = vrcp.pop 32.0
    %v118 = vmul.f32 %v116, %v117
    %v119 = vsub.f32 %v108, %v118
    %v120 = vmul.f32 %v119, %v119
    %v121 = vsel %vm113, %v120, 0.0
    %122 = vadd.xlane.f32.xlu0 %v121
    %v123 = vpop.xlane.xlu0 %122
    %v124 = vmul.f32 %v123, %v117
    %v125 = vadd.f32 %v124, 1e-05
    %v126 = vrsqrt.pop %v125
    %v127 = vmul.f32 %v119, %v126
    %v129 = vlaneseq
    %v130 = vshrl.u32 %v129, 7
    %v131 = vsub.s32 0, %v130
    %v132 = vrot.slane %v111, %v131
    %v134 = vmul.f32 %v127, %v132
    %v136 = vlaneseq
    %v137 = vshrl.u32 %v136, 7
    %v138 = vsub.s32 0, %v137
    %v139 = vrot.slane %v112, %v138
    %v141 = vadd.f32 %v134, %v139
    %v142 = vmax.f32 %v141, 0.0
    %v143 = vld [vmem:[%s3] sm:$0xff]
    %v144 = vld [vmem:[%s3 + $0x8] sm:$0xff]
    %v145 = vld [vmem:[%s3 + $0x10] sm:$0xff]
    %v146 = vld [vmem:[%s3 + $0x18] sm:$0xff]
    %v147 = vld [vmem:[%s4] sm:$0x1]
    %v149 = vlaneseq
    %v150 = vshrl.u32 %v149, 7
    %v151 = vsub.s32 0, %v150
    %v152 = vrot.slane %v147, %v151
    %v155 = vsel %vm113, %v142, 0
    %157 = vmatprep.subr.mxu0 0.0
    %158 = vmatpush1.msra.mxu0 %v143
    %159 = vmatprep.subr.mxu0 0.0
    %160 = vmatpush1.msra.mxu0 %v144
    %161 = vmatprep.subr.mxu0 0.0
    %162 = vmatpush1.msra.mxu0 %v145
    %163 = vmatprep.subr.mxu0 0.0
    %164 = vmatpush1.msra.mxu0 %v146
    %165 = vmatprep.subr.mxu0 0.0
    %166 = vmatpush1.msra.mxu0 0.0
    %167 = vmatprep.subr.mxu0 0.0
    %168 = vmatpush1.msra.mxu0 0.0
    %169 = vmatprep.subr.mxu0 0.0
    %170 = vmatpush1.msra.mxu0 0.0
    %171 = vmatprep.subr.mxu0 0.0
    %172 = vmatpush1.msra.mxu0 0.0
    %173 = vmatprep.subr.mxu0 0.0
    %174 = vmatpush1.msra.mxu0 0.0
    %175 = vmatprep.subr.mxu0 0.0
    %176 = vmatpush1.msra.mxu0 0.0
    %177 = vmatprep.subr.mxu0 0.0
    %178 = vmatpush1.msra.mxu0 0.0
    %179 = vmatprep.subr.mxu0 0.0
    %180 = vmatpush1.msra.mxu0 0.0
    %181 = vmatprep.subr.mxu0 0.0
    %182 = vmatpush1.msra.mxu0 0.0
    %183 = vmatprep.subr.mxu0 0.0
    %184 = vmatpush1.msra.mxu0 0.0
    %185 = vmatprep.subr.mxu0 0.0
    %186 = vmatpush1.msra.mxu0 0.0
    %187 = vmatprep.subr.mxu0 0.0
    %188 = vmatpush1.msra.mxu0 0.0
    %189 = vmatprep.subr.mxu0 0.0
    %190 = vmatpush1.msra.mxu0 0.0
    %191 = vmatprep.subr.mxu0 0.0
    %192 = vmatpush1.msra.mxu0 0.0
    %193 = vmatprep.subr.mxu0 0.0
    %194 = vmatpush1.msra.mxu0 0.0
    %195 = vmatprep.subr.mxu0 0.0
    %196 = vmatpush1.msra.mxu0 0.0
    %197 = vmatprep.subr.mxu0 0.0
    %198 = vmatpush1.msra.mxu0 0.0
    %199 = vmatprep.subr.mxu0 0.0
    %200 = vmatpush1.msra.mxu0 0.0
    %201 = vmatprep.subr.mxu0 0.0
    %202 = vmatpush1.msra.mxu0 0.0
    %203 = vmatprep.subr.mxu0 0.0
    %204 = vmatpush1.msra.mxu0 0.0
    %205 = vmatprep.subr.mxu0 0.0
    %206 = vmatpush1.msra.mxu0 0.0
    %207 = vmatprep.subr.mxu0 0.0
    %208 = vmatpush1.msra.mxu0 0.0
    %209 = vmatprep.subr.mxu0 0.0
    %210 = vmatpush1.msra.mxu0 0.0
    %211 = vmatprep.subr.mxu0 0.0
    %212 = vmatpush1.msra.mxu0 0.0
    %213 = vmatprep.subr.mxu0 0.0
    %214 = vmatpush1.msra.mxu0 0.0
    %215 = vmatprep.subr.mxu0 0.0
    %216 = vmatpush1.msra.mxu0 0.0
    %217 = vmatprep.subr.mxu0 0.0
    %218 = vmatpush1.msra.mxu0 0.0
    %219 = vmatprep.subr.mxu0 0.0
    %220 = vmatpush1.msra.mxu0 0.0
    %221 = vmatprep.mubr.f32.mxu0 0.0
    %222 = vmatmul.mubr.f32.gmra.mrb[0].mxu0 %v155
    %v223 = vpop.f32.mrb[0].mxu0
    %v224 = vadd.f32 %v152, %v223
    %v225 = vpop.f32.mrb[0].mxu0
    %226 = vdwg.mxu0
    %v227 = vmul.f32 %v224, %v224
    %v228 = vsel %vm113, %v227, 0.0
    %v229 = vrot.slane %v228, 4
    %v230 = vadd.f32 %v228, %v229
    %v231 = vrot.slane %v230, 2
    %v232 = vadd.f32 %v230, %v231
    %v233 = vrot.slane %v232, 1
    %v234 = vadd.f32 %v232, %v233
    %v235 = vsel %vm113, %v234, 0.0
    %236 = vadd.xlane.f32.xlu0 %v235
    %v237 = vpop.xlane.xlu0 %236
    %vm238 = vcmask 523520
    %v239 = vsel %vm238, %v227, 0.0
    %v240 = vrot.slane %v239, 4
    %v241 = vadd.f32 %v239, %v240
    %v242 = vrot.slane %v241, 2
    %v243 = vadd.f32 %v241, %v242
    %v244 = vrot.slane %v243, 1
    %v245 = vadd.f32 %v243, %v244
    %247 = vrot.lane.b32.xlu0 %v245, 96
    %v248 = vpop.permute.xlu0 %247
    %v250 = vsel %vm113, %v248, 0.0
    %251 = vadd.xlane.f32.xlu0 %v250
    %v252 = vpop.xlane.xlu0 %251
    %v253 = vrsqrt.pop %v237
    %v254 = vrsqrt.pop %v252
    %v255 = vmul.f32 %v253, %v254
    %v256 = vsel %vm238, %v224, 0.0
    %v257 = vrot.slane %v256, 4
    %v258 = vadd.f32 %v256, %v257
    %v259 = vrot.slane %v258, 2
    %v260 = vadd.f32 %v258, %v259
    %v261 = vrot.slane %v260, 1
    %v262 = vadd.f32 %v260, %v261
    %264 = vrot.lane.b32.xlu0 %v224, 96
    %v265 = vpop.permute.xlu0 %264
    %267 = vxpose.xlu0.b32.start [1/16] %v265, 128
    %268 = vxpose.xlu0.b32.cont [2/16] 0.0, 128
    %269 = vxpose.xlu0.b32.cont [3/16] 0.0, 128
    %270 = vxpose.xlu0.b32.cont [4/16] 0.0, 128
    %271 = vxpose.xlu0.b32.cont [5/16] 0.0, 128
    %272 = vxpose.xlu0.b32.cont [6/16] 0.0, 128
    %273 = vxpose.xlu0.b32.cont [7/16] 0.0, 128
    %274 = vxpose.xlu0.b32.cont [8/16] 0.0, 128
    %275 = vxpose.xlu0.b32.cont [9/16] 0.0, 128
    %276 = vxpose.xlu0.b32.cont [10/16] 0.0, 128
    %277 = vxpose.xlu0.b32.cont [11/16] 0.0, 128
    %278 = vxpose.xlu0.b32.cont [12/16] 0.0, 128
    %279 = vxpose.xlu0.b32.cont [13/16] 0.0, 128
    %280 = vxpose.xlu0.b32.cont [14/16] 0.0, 128
    %281 = vxpose.xlu0.b32.cont [15/16] 0.0, 128
    %282 = vxpose.xlu0.b32.end [16/16] 0.0, 128
    %v283 = vpop.trf.xlu0
    %v284 = vpop.trf.xlu0
    %v285 = vpop.trf.xlu0
    %v286 = vpop.trf.xlu0
    %v287 = vpop.trf.xlu0
    %v288 = vpop.trf.xlu0
    %v289 = vpop.trf.xlu0
    %v290 = vpop.trf.xlu0
    %v291 = vpop.trf.xlu0
    %v292 = vpop.trf.xlu0
    %v293 = vpop.trf.xlu0
    %v294 = vpop.trf.xlu0
    %v295 = vpop.trf.xlu0
    %v296 = vpop.trf.xlu0
    %v297 = vpop.trf.xlu0
    %v298 = vpop.trf.xlu0
    %299 = vrot.lane.b32.xlu0 %v224, 64
    %v300 = vpop.permute.xlu0 %299
    %vm302 = vcmask 64512
    %v304 = vsel %vm302, %v283, 0
    %v307 = vsel %vm302, %v284, 0
    %v310 = vsel %vm302, %v285, 0
    %v313 = vsel %vm302, %v286, 0
    %315 = vmatprep.subr.mxu0 0.0
    %316 = vmatpush1.msra.mxu0 %v300
    %317 = vmatprep.subr.mxu0 0.0
    %318 = vmatpush1.msra.mxu0 0.0
    %319 = vmatprep.subr.mxu0 0.0
    %320 = vmatpush1.msra.mxu0 0.0
    %321 = vmatprep.subr.mxu0 0.0
    %322 = vmatpush1.msra.mxu0 0.0
    %323 = vmatprep.subr.mxu0 0.0
    %324 = vmatpush1.msra.mxu0 0.0
    %325 = vmatprep.subr.mxu0 0.0
    %326 = vmatpush1.msra.mxu0 0.0
    %327 = vmatprep.subr.mxu0 0.0
    %328 = vmatpush1.msra.mxu0 0.0
    %329 = vmatprep.subr.mxu0 0.0
    %330 = vmatpush1.msra.mxu0 0.0
    %331 = vmatprep.subr.mxu0 0.0
    %332 = vmatpush1.msra.mxu0 0.0
    %333 = vmatprep.subr.mxu0 0.0
    %334 = vmatpush1.msra.mxu0 0.0
    %335 = vmatprep.subr.mxu0 0.0
    %336 = vmatpush1.msra.mxu0 0.0
    %337 = vmatprep.subr.mxu0 0.0
    %338 = vmatpush1.msra.mxu0 0.0
    %339 = vmatprep.subr.mxu0 0.0
    %340 = vmatpush1.msra.mxu0 0.0
    %341 = vmatprep.subr.mxu0 0.0
    %342 = vmatpush1.msra.mxu0 0.0
    %343 = vmatprep.subr.mxu0 0.0
    %344 = vmatpush1.msra.mxu0 0.0
    %345 = vmatprep.subr.mxu0 0.0
    %346 = vmatpush1.msra.mxu0 0.0
    %347 = vmatprep.subr.mxu0 0.0
    %348 = vmatpush1.msra.mxu0 0.0
    %349 = vmatprep.subr.mxu0 0.0
    %350 = vmatpush1.msra.mxu0 0.0
    %351 = vmatprep.subr.mxu0 0.0
    %352 = vmatpush1.msra.mxu0 0.0
    %353 = vmatprep.subr.mxu0 0.0
    %354 = vmatpush1.msra.mxu0 0.0
    %355 = vmatprep.subr.mxu0 0.0
    %356 = vmatpush1.msra.mxu0 0.0
    %357 = vmatprep.subr.mxu0 0.0
    %358 = vmatpush1.msra.mxu0 0.0
    %359 = vmatprep.subr.mxu0 0.0
    %360 = vmatpush1.msra.mxu0 0.0
    %361 = vmatprep.subr.mxu0 0.0
    %362 = vmatpush1.msra.mxu0 0.0
    %363 = vmatprep.subr.mxu0 0.0
    %364 = vmatpush1.msra.mxu0 0.0
    %365 = vmatprep.subr.mxu0 0.0
    %366 = vmatpush1.msra.mxu0 0.0
    %367 = vmatprep.subr.mxu0 0.0
    %368 = vmatpush1.msra.mxu0 0.0
    %369 = vmatprep.subr.mxu0 0.0
    %370 = vmatpush1.msra.mxu0 0.0
    %371 = vmatprep.subr.mxu0 0.0
    %372 = vmatpush1.msra.mxu0 0.0
    %373 = vmatprep.subr.mxu0 0.0
    %374 = vmatpush1.msra.mxu0 0.0
    %375 = vmatprep.subr.mxu0 0.0
    %376 = vmatpush1.msra.mxu0 0.0
    %377 = vmatprep.subr.mxu0 0.0
    %378 = vmatpush1.msra.mxu0 0.0
    %379 = vmatprep.mubr.f32.mxu0 0.0
    %380 = vmatmul.mubr.f32.gmra.mrb[0].mxu0 %v304
    %v381 = vpop.f32.mrb[0].mxu0
    %v382 = vadd.f32 0.0, %v381
    %v383 = vpop.f32.mrb[0].mxu0
    %384 = vmatprep.mubr.f32.mxu0 0.0
    %385 = vmatmul.mubr.f32.gmra.mrb[0].mxu0 %v307
    %v386 = vpop.f32.mrb[0].mxu0
    %v387 = vadd.f32 0.0, %v386
    %v388 = vpop.f32.mrb[0].mxu0
    %389 = vmatprep.mubr.f32.mxu0 0.0
    %390 = vmatmul.mubr.f32.gmra.mrb[0].mxu0 %v310
    %v391 = vpop.f32.mrb[0].mxu0
    %v392 = vadd.f32 0.0, %v391
    %v393 = vpop.f32.mrb[0].mxu0
    %394 = vmatprep.mubr.f32.mxu0 0.0
    %395 = vmatmul.mubr.f32.gmra.mrb[0].mxu0 %v313
    %v396 = vpop.f32.mrb[0].mxu0
    %v397 = vadd.f32 0.0, %v396
    %v398 = vpop.f32.mrb[0].mxu0
    %399 = vdwg.mxu0
    %v400 = vsel %vm113, %v224, 0
    %402 = vmatprep.subr.mxu0 0.0
    %403 = vmatpush1.msra.mxu0 %v382
    %404 = vmatprep.subr.mxu0 0.0
    %405 = vmatpush1.msra.mxu0 %v387
    %406 = vmatprep.subr.mxu0 0.0
    %407 = vmatpush1.msra.mxu0 %v392
    %408 = vmatprep.subr.mxu0 0.0
    %409 = vmatpush1.msra.mxu0 %v397
    %410 = vmatprep.subr.mxu0 0.0
    %411 = vmatpush1.msra.mxu0 0.0
    %412 = vmatprep.subr.mxu0 0.0
    %413 = vmatpush1.msra.mxu0 0.0
    %414 = vmatprep.subr.mxu0 0.0
    %415 = vmatpush1.msra.mxu0 0.0
    %416 = vmatprep.subr.mxu0 0.0
    %417 = vmatpush1.msra.mxu0 0.0
    %418 = vmatprep.subr.mxu0 0.0
    %419 = vmatpush1.msra.mxu0 0.0
    %420 = vmatprep.subr.mxu0 0.0
    %421 = vmatpush1.msra.mxu0 0.0
    %422 = vmatprep.subr.mxu0 0.0
    %423 = vmatpush1.msra.mxu0 0.0
    %424 = vmatprep.subr.mxu0 0.0
    %425 = vmatpush1.msra.mxu0 0.0
    %426 = vmatprep.subr.mxu0 0.0
    %427 = vmatpush1.msra.mxu0 0.0
    %428 = vmatprep.subr.mxu0 0.0
    %429 = vmatpush1.msra.mxu0 0.0
    %430 = vmatprep.subr.mxu0 0.0
    %431 = vmatpush1.msra.mxu0 0.0
    %432 = vmatprep.subr.mxu0 0.0
    %433 = vmatpush1.msra.mxu0 0.0
    %434 = vmatprep.subr.mxu0 0.0
    %435 = vmatpush1.msra.mxu0 0.0
    %436 = vmatprep.subr.mxu0 0.0
    %437 = vmatpush1.msra.mxu0 0.0
    %438 = vmatprep.subr.mxu0 0.0
    %439 = vmatpush1.msra.mxu0 0.0
    %440 = vmatprep.subr.mxu0 0.0
    %441 = vmatpush1.msra.mxu0 0.0
    %442 = vmatprep.subr.mxu0 0.0
    %443 = vmatpush1.msra.mxu0 0.0
    %444 = vmatprep.subr.mxu0 0.0
    %445 = vmatpush1.msra.mxu0 0.0
    %446 = vmatprep.subr.mxu0 0.0
    %447 = vmatpush1.msra.mxu0 0.0
    %448 = vmatprep.subr.mxu0 0.0
    %449 = vmatpush1.msra.mxu0 0.0
    %450 = vmatprep.subr.mxu0 0.0
    %451 = vmatpush1.msra.mxu0 0.0
    %452 = vmatprep.subr.mxu0 0.0
    %453 = vmatpush1.msra.mxu0 0.0
    %454 = vmatprep.subr.mxu0 0.0
    %455 = vmatpush1.msra.mxu0 0.0
    %456 = vmatprep.subr.mxu0 0.0
    %457 = vmatpush1.msra.mxu0 0.0
    %458 = vmatprep.subr.mxu0 0.0
    %459 = vmatpush1.msra.mxu0 0.0
    %460 = vmatprep.subr.mxu0 0.0
    %461 = vmatpush1.msra.mxu0 0.0
    %462 = vmatprep.subr.mxu0 0.0
    %463 = vmatpush1.msra.mxu0 0.0
    %464 = vmatprep.subr.mxu0 0.0
    %465 = vmatpush1.msra.mxu0 0.0
    %466 = vmatprep.mubr.f32.mxu0 0.0
    %467 = vmatmul.mubr.f32.gmra.mrb[0].mxu0 %v400
    %v468 = vpop.f32.mrb[0].mxu0
    %v469 = vadd.f32 0.0, %v468
    %v470 = vpop.f32.mrb[0].mxu0
    %471 = vdwg.mxu0
    %v472 = vmul.f32 %v469, %v255
    %v473 = vmul.f32 %v224, 8.0
    %475 = vrot.lane.b32.xlu0 %v473, 64
    %v476 = vpop.permute.xlu0 %475
    %v478 = vadd.f32 %v472, %v476
    %480 = vrot.lane.b32.xlu0 %v262, 96
    %v481 = vpop.permute.xlu0 %480
    %v483 = vmul.f32 %v224, %v481
    %v484 = vsel %vm113, %v483, 0.0
    %485 = vadd.xlane.f32.xlu0 %v484
    %v486 = vpop.xlane.xlu0 %485
    %v487 = vmul.f32 %v486, %v255
    %v488 = vadd.f32 %v487, 8.0
    %v489 = vrcp.pop %v488
    %v490 = vmul.f32 %v478, %v489
    %v491 = vmul.f32 %v490, 0.5
    %v492 = vmul.f32 %v142, 0.5
    %v493 = vadd.f32 %v491, %v492
    %s494 = scalar_lea.vmem %s5, 1
    %v495 = vld [vmem:[%s494] sm:$0x1]
    %s496 = scalar_lea.vmem %s6, 1
    %v497 = vld [vmem:[%s496] sm:$0x1]
    %v498 = vsel %vm113, %v493, 0.0
    %499 = vadd.xlane.f32.xlu0 %v498
    %v500 = vpop.xlane.xlu0 %499
    %v501 = vmul.f32 %v500, %v117
    %v502 = vsub.f32 %v493, %v501
    %v503 = vmul.f32 %v502, %v502
    %v504 = vsel %vm113, %v503, 0.0
    %505 = vadd.xlane.f32.xlu0 %v504
    %v506 = vpop.xlane.xlu0 %505
    %v507 = vmul.f32 %v506, %v117
    %v508 = vadd.f32 %v507, 1e-05
    %v509 = vrsqrt.pop %v508
    %v510 = vmul.f32 %v502, %v509
    %v512 = vlaneseq
    %v513 = vshrl.u32 %v512, 7
    %v514 = vsub.s32 0, %v513
    %v515 = vrot.slane %v495, %v514
    %v517 = vmul.f32 %v510, %v515
    %v519 = vlaneseq
    %v520 = vshrl.u32 %v519, 7
    %v521 = vsub.s32 0, %v520
    %v522 = vrot.slane %v497, %v521
    %v524 = vadd.f32 %v517, %v522
    %s525 = scalar_lea.vmem %s3, 32
    %v526 = vld [vmem:[%s525] sm:$0xff]
    %v527 = vld [vmem:[%s525 + $0x8] sm:$0xff]
    %v528 = vld [vmem:[%s525 + $0x10] sm:$0xff]
    %v529 = vld [vmem:[%s525 + $0x18] sm:$0xff]
    %s530 = scalar_lea.vmem %s4, 1
    %v531 = vld [vmem:[%s530] sm:$0x1]
    %v533 = vlaneseq
    %v534 = vshrl.u32 %v533, 7
    %v535 = vsub.s32 0, %v534
    %v536 = vrot.slane %v531, %v535
    %v539 = vsel %vm113, %v524, 0
    %541 = vmatprep.subr.mxu0 0.0
    %542 = vmatpush1.msra.mxu0 %v526
    %543 = vmatprep.subr.mxu0 0.0
    %544 = vmatpush1.msra.mxu0 %v527
    %545 = vmatprep.subr.mxu0 0.0
    %546 = vmatpush1.msra.mxu0 %v528
    %547 = vmatprep.subr.mxu0 0.0
    %548 = vmatpush1.msra.mxu0 %v529
    %549 = vmatprep.subr.mxu0 0.0
    %550 = vmatpush1.msra.mxu0 0.0
    %551 = vmatprep.subr.mxu0 0.0
    %552 = vmatpush1.msra.mxu0 0.0
    %553 = vmatprep.subr.mxu0 0.0
    %554 = vmatpush1.msra.mxu0 0.0
    %555 = vmatprep.subr.mxu0 0.0
    %556 = vmatpush1.msra.mxu0 0.0
    %557 = vmatprep.subr.mxu0 0.0
    %558 = vmatpush1.msra.mxu0 0.0
    %559 = vmatprep.subr.mxu0 0.0
    %560 = vmatpush1.msra.mxu0 0.0
    %561 = vmatprep.subr.mxu0 0.0
    %562 = vmatpush1.msra.mxu0 0.0
    %563 = vmatprep.subr.mxu0 0.0
    %564 = vmatpush1.msra.mxu0 0.0
    %565 = vmatprep.subr.mxu0 0.0
    %566 = vmatpush1.msra.mxu0 0.0
    %567 = vmatprep.subr.mxu0 0.0
    %568 = vmatpush1.msra.mxu0 0.0
    %569 = vmatprep.subr.mxu0 0.0
    %570 = vmatpush1.msra.mxu0 0.0
    %571 = vmatprep.subr.mxu0 0.0
    %572 = vmatpush1.msra.mxu0 0.0
    %573 = vmatprep.subr.mxu0 0.0
    %574 = vmatpush1.msra.mxu0 0.0
    %575 = vmatprep.subr.mxu0 0.0
    %576 = vmatpush1.msra.mxu0 0.0
    %577 = vmatprep.subr.mxu0 0.0
    %578 = vmatpush1.msra.mxu0 0.0
    %579 = vmatprep.subr.mxu0 0.0
    %580 = vmatpush1.msra.mxu0 0.0
    %581 = vmatprep.subr.mxu0 0.0
    %582 = vmatpush1.msra.mxu0 0.0
    %583 = vmatprep.subr.mxu0 0.0
    %584 = vmatpush1.msra.mxu0 0.0
    %585 = vmatprep.subr.mxu0 0.0
    %586 = vmatpush1.msra.mxu0 0.0
    %587 = vmatprep.subr.mxu0 0.0
    %588 = vmatpush1.msra.mxu0 0.0
    %589 = vmatprep.subr.mxu0 0.0
    %590 = vmatpush1.msra.mxu0 0.0
    %591 = vmatprep.subr.mxu0 0.0
    %592 = vmatpush1.msra.mxu0 0.0
    %593 = vmatprep.subr.mxu0 0.0
    %594 = vmatpush1.msra.mxu0 0.0
    %595 = vmatprep.subr.mxu0 0.0
    %596 = vmatpush1.msra.mxu0 0.0
    %597 = vmatprep.subr.mxu0 0.0
    %598 = vmatpush1.msra.mxu0 0.0
    %599 = vmatprep.subr.mxu0 0.0
    %600 = vmatpush1.msra.mxu0 0.0
    %601 = vmatprep.subr.mxu0 0.0
    %602 = vmatpush1.msra.mxu0 0.0
    %603 = vmatprep.subr.mxu0 0.0
    %604 = vmatpush1.msra.mxu0 0.0
    %605 = vmatprep.mubr.f32.mxu0 0.0
    %606 = vmatmul.mubr.f32.gmra.mrb[0].mxu0 %v539
    %v607 = vpop.f32.mrb[0].mxu0
    %v608 = vadd.f32 %v536, %v607
    %v609 = vpop.f32.mrb[0].mxu0
    %610 = vdwg.mxu0
    %v611 = vmul.f32 %v608, %v608
    %v612 = vsel %vm113, %v611, 0.0
    %v613 = vrot.slane %v612, 4
    %v614 = vadd.f32 %v612, %v613
    %v615 = vrot.slane %v614, 2
    %v616 = vadd.f32 %v614, %v615
    %v617 = vrot.slane %v616, 1
    %v618 = vadd.f32 %v616, %v617
    %v619 = vsel %vm113, %v618, 0.0
    %620 = vadd.xlane.f32.xlu0 %v619
    %v621 = vpop.xlane.xlu0 %620
    %v622 = vsel %vm238, %v611, 0.0
    %v623 = vrot.slane %v622, 4
    %v624 = vadd.f32 %v622, %v623
    %v625 = vrot.slane %v624, 2
    %v626 = vadd.f32 %v624, %v625
    %v627 = vrot.slane %v626, 1
    %v628 = vadd.f32 %v626, %v627
    %630 = vrot.lane.b32.xlu0 %v628, 96
    %v631 = vpop.permute.xlu0 %630
    %v633 = vsel %vm113, %v631, 0.0
    %634 = vadd.xlane.f32.xlu0 %v633
    %v635 = vpop.xlane.xlu0 %634
    %v636 = vrsqrt.pop %v621
    %v637 = vrsqrt.pop %v635
    %v638 = vmul.f32 %v636, %v637
    %v639 = vsel %vm238, %v608, 0.0
    %v640 = vrot.slane %v639, 4
    %v641 = vadd.f32 %v639, %v640
    %v642 = vrot.slane %v641, 2
    %v643 = vadd.f32 %v641, %v642
    %v644 = vrot.slane %v643, 1
    %v645 = vadd.f32 %v643, %v644
    %647 = vrot.lane.b32.xlu0 %v608, 96
    %v648 = vpop.permute.xlu0 %647
    %650 = vxpose.xlu0.b32.start [1/16] %v648, 128
    %651 = vxpose.xlu0.b32.cont [2/16] 0.0, 128
    %652 = vxpose.xlu0.b32.cont [3/16] 0.0, 128
    %653 = vxpose.xlu0.b32.cont [4/16] 0.0, 128
    %654 = vxpose.xlu0.b32.cont [5/16] 0.0, 128
    %655 = vxpose.xlu0.b32.cont [6/16] 0.0, 128
    %656 = vxpose.xlu0.b32.cont [7/16] 0.0, 128
    %657 = vxpose.xlu0.b32.cont [8/16] 0.0, 128
    %658 = vxpose.xlu0.b32.cont [9/16] 0.0, 128
    %659 = vxpose.xlu0.b32.cont [10/16] 0.0, 128
    %660 = vxpose.xlu0.b32.cont [11/16] 0.0, 128
    %661 = vxpose.xlu0.b32.cont [12/16] 0.0, 128
    %662 = vxpose.xlu0.b32.cont [13/16] 0.0, 128
    %663 = vxpose.xlu0.b32.cont [14/16] 0.0, 128
    %664 = vxpose.xlu0.b32.cont [15/16] 0.0, 128
    %665 = vxpose.xlu0.b32.end [16/16] 0.0, 128
    %v666 = vpop.trf.xlu0
    %v667 = vpop.trf.xlu0
    %v668 = vpop.trf.xlu0
    %v669 = vpop.trf.xlu0
    %v670 = vpop.trf.xlu0
    %v671 = vpop.trf.xlu0
    %v672 = vpop.trf.xlu0
    %v673 = vpop.trf.xlu0
    %v674 = vpop.trf.xlu0
    %v675 = vpop.trf.xlu0
    %v676 = vpop.trf.xlu0
    %v677 = vpop.trf.xlu0
    %v678 = vpop.trf.xlu0
    %v679 = vpop.trf.xlu0
    %v680 = vpop.trf.xlu0
    %v681 = vpop.trf.xlu0
    %682 = vrot.lane.b32.xlu0 %v608, 64
    %v683 = vpop.permute.xlu0 %682
    %v686 = vsel %vm302, %v666, 0
    %v689 = vsel %vm302, %v667, 0
    %v692 = vsel %vm302, %v668, 0
    %v695 = vsel %vm302, %v669, 0
    %697 = vmatprep.subr.mxu0 0.0
    %698 = vmatpush1.msra.mxu0 %v683
    %699 = vmatprep.subr.mxu0 0.0
    %700 = vmatpush1.msra.mxu0 0.0
    %701 = vmatprep.subr.mxu0 0.0
    %702 = vmatpush1.msra.mxu0 0.0
    %703 = vmatprep.subr.mxu0 0.0
    %704 = vmatpush1.msra.mxu0 0.0
    %705 = vmatprep.subr.mxu0 0.0
    %706 = vmatpush1.msra.mxu0 0.0
    %707 = vmatprep.subr.mxu0 0.0
    %708 = vmatpush1.msra.mxu0 0.0
    %709 = vmatprep.subr.mxu0 0.0
    %710 = vmatpush1.msra.mxu0 0.0
    %711 = vmatprep.subr.mxu0 0.0
    %712 = vmatpush1.msra.mxu0 0.0
    %713 = vmatprep.subr.mxu0 0.0
    %714 = vmatpush1.msra.mxu0 0.0
    %715 = vmatprep.subr.mxu0 0.0
    %716 = vmatpush1.msra.mxu0 0.0
    %717 = vmatprep.subr.mxu0 0.0
    %718 = vmatpush1.msra.mxu0 0.0
    %719 = vmatprep.subr.mxu0 0.0
    %720 = vmatpush1.msra.mxu0 0.0
    %721 = vmatprep.subr.mxu0 0.0
    %722 = vmatpush1.msra.mxu0 0.0
    %723 = vmatprep.subr.mxu0 0.0
    %724 = vmatpush1.msra.mxu0 0.0
    %725 = vmatprep.subr.mxu0 0.0
    %726 = vmatpush1.msra.mxu0 0.0
    %727 = vmatprep.subr.mxu0 0.0
    %728 = vmatpush1.msra.mxu0 0.0
    %729 = vmatprep.subr.mxu0 0.0
    %730 = vmatpush1.msra.mxu0 0.0
    %731 = vmatprep.subr.mxu0 0.0
    %732 = vmatpush1.msra.mxu0 0.0
    %733 = vmatprep.subr.mxu0 0.0
    %734 = vmatpush1.msra.mxu0 0.0
    %735 = vmatprep.subr.mxu0 0.0
    %736 = vmatpush1.msra.mxu0 0.0
    %737 = vmatprep.subr.mxu0 0.0
    %738 = vmatpush1.msra.mxu0 0.0
    %739 = vmatprep.subr.mxu0 0.0
    %740 = vmatpush1.msra.mxu0 0.0
    %741 = vmatprep.subr.mxu0 0.0
    %742 = vmatpush1.msra.mxu0 0.0
    %743 = vmatprep.subr.mxu0 0.0
    %744 = vmatpush1.msra.mxu0 0.0
    %745 = vmatprep.subr.mxu0 0.0
    %746 = vmatpush1.msra.mxu0 0.0
    %747 = vmatprep.subr.mxu0 0.0
    %748 = vmatpush1.msra.mxu0 0.0
    %749 = vmatprep.subr.mxu0 0.0
    %750 = vmatpush1.msra.mxu0 0.0
    %751 = vmatprep.subr.mxu0 0.0
    %752 = vmatpush1.msra.mxu0 0.0
    %753 = vmatprep.subr.mxu0 0.0
    %754 = vmatpush1.msra.mxu0 0.0
    %755 = vmatprep.subr.mxu0 0.0
    %756 = vmatpush1.msra.mxu0 0.0
    %757 = vmatprep.subr.mxu0 0.0
    %758 = vmatpush1.msra.mxu0 0.0
    %759 = vmatprep.subr.mxu0 0.0
    %760 = vmatpush1.msra.mxu0 0.0
    %761 = vmatprep.mubr.f32.mxu0 0.0
    %762 = vmatmul.mubr.f32.gmra.mrb[0].mxu0 %v686
    %v763 = vpop.f32.mrb[0].mxu0
    %v764 = vadd.f32 0.0, %v763
    %v765 = vpop.f32.mrb[0].mxu0
    %766 = vmatprep.mubr.f32.mxu0 0.0
    %767 = vmatmul.mubr.f32.gmra.mrb[0].mxu0 %v689
    %v768 = vpop.f32.mrb[0].mxu0
    %v769 = vadd.f32 0.0, %v768
    %v770 = vpop.f32.mrb[0].mxu0
    %771 = vmatprep.mubr.f32.mxu0 0.0
    %772 = vmatmul.mubr.f32.gmra.mrb[0].mxu0 %v692
    %v773 = vpop.f32.mrb[0].mxu0
    %v774 = vadd.f32 0.0, %v773
    %v775 = vpop.f32.mrb[0].mxu0
    %776 = vmatprep.mubr.f32.mxu0 0.0
    %777 = vmatmul.mubr.f32.gmra.mrb[0].mxu0 %v695
    %v778 = vpop.f32.mrb[0].mxu0
    %v779 = vadd.f32 0.0, %v778
    %v780 = vpop.f32.mrb[0].mxu0
    %781 = vdwg.mxu0
    %v782 = vsel %vm113, %v608, 0
    %784 = vmatprep.subr.mxu0 0.0
    %785 = vmatpush1.msra.mxu0 %v764
    %786 = vmatprep.subr.mxu0 0.0
    %787 = vmatpush1.msra.mxu0 %v769
    %788 = vmatprep.subr.mxu0 0.0
    %789 = vmatpush1.msra.mxu0 %v774
    %790 = vmatprep.subr.mxu0 0.0
    %791 = vmatpush1.msra.mxu0 %v779
    %792 = vmatprep.subr.mxu0 0.0
    %793 = vmatpush1.msra.mxu0 0.0
    %794 = vmatprep.subr.mxu0 0.0
    %795 = vmatpush1.msra.mxu0 0.0
    %796 = vmatprep.subr.mxu0 0.0
    %797 = vmatpush1.msra.mxu0 0.0
    %798 = vmatprep.subr.mxu0 0.0
    %799 = vmatpush1.msra.mxu0 0.0
    %800 = vmatprep.subr.mxu0 0.0
    %801 = vmatpush1.msra.mxu0 0.0
    %802 = vmatprep.subr.mxu0 0.0
    %803 = vmatpush1.msra.mxu0 0.0
    %804 = vmatprep.subr.mxu0 0.0
    %805 = vmatpush1.msra.mxu0 0.0
    %806 = vmatprep.subr.mxu0 0.0
    %807 = vmatpush1.msra.mxu0 0.0
    %808 = vmatprep.subr.mxu0 0.0
    %809 = vmatpush1.msra.mxu0 0.0
    %810 = vmatprep.subr.mxu0 0.0
    %811 = vmatpush1.msra.mxu0 0.0
    %812 = vmatprep.subr.mxu0 0.0
    %813 = vmatpush1.msra.mxu0 0.0
    %814 = vmatprep.subr.mxu0 0.0
    %815 = vmatpush1.msra.mxu0 0.0
    %816 = vmatprep.subr.mxu0 0.0
    %817 = vmatpush1.msra.mxu0 0.0
    %818 = vmatprep.subr.mxu0 0.0
    %819 = vmatpush1.msra.mxu0 0.0
    %820 = vmatprep.subr.mxu0 0.0
    %821 = vmatpush1.msra.mxu0 0.0
    %822 = vmatprep.subr.mxu0 0.0
    %823 = vmatpush1.msra.mxu0 0.0
    %824 = vmatprep.subr.mxu0 0.0
    %825 = vmatpush1.msra.mxu0 0.0
    %826 = vmatprep.subr.mxu0 0.0
    %827 = vmatpush1.msra.mxu0 0.0
    %828 = vmatprep.subr.mxu0 0.0
    %829 = vmatpush1.msra.mxu0 0.0
    %830 = vmatprep.subr.mxu0 0.0
    %831 = vmatpush1.msra.mxu0 0.0
    %832 = vmatprep.subr.mxu0 0.0
    %833 = vmatpush1.msra.mxu0 0.0
    %834 = vmatprep.subr.mxu0 0.0
    %835 = vmatpush1.msra.mxu0 0.0
    %836 = vmatprep.subr.mxu0 0.0
    %837 = vmatpush1.msra.mxu0 0.0
    %838 = vmatprep.subr.mxu0 0.0
    %839 = vmatpush1.msra.mxu0 0.0
    %840 = vmatprep.subr.mxu0 0.0
    %841 = vmatpush1.msra.mxu0 0.0
    %842 = vmatprep.subr.mxu0 0.0
    %843 = vmatpush1.msra.mxu0 0.0
    %844 = vmatprep.subr.mxu0 0.0
    %845 = vmatpush1.msra.mxu0 0.0
    %846 = vmatprep.subr.mxu0 0.0
    %847 = vmatpush1.msra.mxu0 0.0
    %848 = vmatprep.mubr.f32.mxu0 0.0
    %849 = vmatmul.mubr.f32.gmra.mrb[0].mxu0 %v782
    %v850 = vpop.f32.mrb[0].mxu0
    %v851 = vadd.f32 0.0, %v850
    %v852 = vpop.f32.mrb[0].mxu0
    %853 = vdwg.mxu0
    %v854 = vmul.f32 %v851, %v638
    %v855 = vmul.f32 %v608, 8.0
    %857 = vrot.lane.b32.xlu0 %v855, 64
    %v858 = vpop.permute.xlu0 %857
    %v860 = vadd.f32 %v854, %v858
    %862 = vrot.lane.b32.xlu0 %v645, 96
    %v863 = vpop.permute.xlu0 %862
    %v865 = vmul.f32 %v608, %v863
    %v866 = vsel %vm113, %v865, 0.0
    %867 = vadd.xlane.f32.xlu0 %v866
    %v868 = vpop.xlane.xlu0 %867
    %v869 = vmul.f32 %v868, %v638
    %v870 = vadd.f32 %v869, 8.0
    %v871 = vrcp.pop %v870
    %v872 = vmul.f32 %v860, %v871
    %v873 = vmul.f32 %v872, 0.5
    %v874 = vmul.f32 %v524, 0.5
    %v875 = vadd.f32 %v873, %v874
    %s876 = scalar_lea.vmem %s5, 2
    %v877 = vld [vmem:[%s876] sm:$0x1]
    %s878 = scalar_lea.vmem %s6, 2
    %v879 = vld [vmem:[%s878] sm:$0x1]
    %v880 = vsel %vm113, %v875, 0.0
    %881 = vadd.xlane.f32.xlu0 %v880
    %v882 = vpop.xlane.xlu0 %881
    %v883 = vmul.f32 %v882, %v117
    %v884 = vsub.f32 %v875, %v883
    %v885 = vmul.f32 %v884, %v884
    %v886 = vsel %vm113, %v885, 0.0
    %887 = vadd.xlane.f32.xlu0 %v886
    %v888 = vpop.xlane.xlu0 %887
    %v889 = vmul.f32 %v888, %v117
    %v890 = vadd.f32 %v889, 1e-05
    %v891 = vrsqrt.pop %v890
    %v892 = vmul.f32 %v884, %v891
    %v894 = vlaneseq
    %v895 = vshrl.u32 %v894, 7
    %v896 = vsub.s32 0, %v895
    %v897 = vrot.slane %v877, %v896
    %v899 = vmul.f32 %v892, %v897
    %v901 = vlaneseq
    %v902 = vshrl.u32 %v901, 7
    %v903 = vsub.s32 0, %v902
    %v904 = vrot.slane %v879, %v903
    %v906 = vadd.f32 %v899, %v904
    %907 = vst.msk [vmem:[#allocation2] sm:$0xff] %vm113, %v906
    // Predicated region
    $region30: #{trans_conv_forward.1} parent=1 // pred_check
      _
    $region31: #{trans_conv_forward.1} parent=1 // pred_check_branch
      %909 = sbr.rel (0) target = $region33
    $region32: #{trans_conv_forward.1} parent=1 // pred_region
      %s911 = ssub.s32 128, 128
      %912 = vsyncadd [#allocation3], %s911
      %s914 = sshll.u32 [#allocation2], 4
      %s915 = int_to_ptr.vmem [resolvable:$true] %s914
      %917 = dma.vmem_to_hbm [thread:$0]  %s915, 128, %s7, [#allocation3]
    $region33: #{trans_conv_forward.1} parent=1 // pred_fallthru
      _
    // Predicated region
    $region34: #{trans_conv_forward.1} parent=1 // pred_check
      _
    $region35: #{trans_conv_forward.1} parent=1 // pred_check_branch
      %919 = sbr.rel (0) target = $region37
    $region36: #{trans_conv_forward.1} parent=1 // pred_region
      %920 = dma.done [#allocation3], 128
    $region37: #{trans_conv_forward.1} parent=1 // pred_fallthru
      _
    %921 = vsyncpa [#allocation3], 1

</llo_original>
